<compile_context>
chip_gen: v7x
topology: tpu7x:2x2x1
jax: 0.10.0
libtpu: 0.0.40
codegen_flags: <defaults>
</compile_context>

<pallas_src>
import functools

import jax
import jax.numpy as jnp
from jax.experimental import pallas as pl
from jax.experimental.pallas import tpu as pltpu


def _round_up(x, m):
    return ((x + m - 1) // m) * m


def _pick_row_tile(H, max_rows=64):
    """Largest divisor of H that is <= max_rows (falls back to full H)."""
    if H <= max_rows:
        return H
    for th in range(max_rows, 0, -1):
        if H % th == 0:
            return th
    return H


def _vmem_bytes(shape, dtype):
    """Conservative physical VMEM footprint of one buffer (lane/sublane padded)."""
    itemsize = jnp.dtype(dtype).itemsize
    s = list(shape)
    if len(s) >= 1:
        s[-1] = _round_up(s[-1], 128)
    if len(s) >= 2:
        s[-2] = _round_up(s[-2], 8 * max(1, 4 // itemsize))
    n = 1
    for d in s:
        n *= d
    return n * itemsize


# ----------------------------------------------------------------------------
# Pallas kernel: fused conv (KH matmuls, K = KW*Cin) + folded-BN bias + ReLU
# ----------------------------------------------------------------------------
def _conv_bn_relu_kernel(x_ref, w_ref, b_ref, o_ref, xs_ref, *,
                         TH, THp, W8, KH, KW, Cin, Cout):
    """One (batch, row-tile) per grid step.

    x_ref : (1, 1, THp, Wp, Cin)   bf16  zero-padded input rows (halo included)
    w_ref : (KH, KW*Cin, Cout)     bf16  BN-folded weights, dj/channel packed along K
    b_ref : (1, Cout)              f32   BN-folded bias
    o_ref : (1, 1, TH*W8, Cout)    bf16  output rows (flattened spatial)
    xs_ref: (THp*W8, KW*Cin)       bf16  scratch: column-shifted input packed along K
    """
    x = x_ref[0, 0]                                        # (THp, Wp, Cin)

    # Build the KW column-shifted views ONCE per grid step (KW small packed stores);
    # every row tap below is then a plain, sublane-aligned slice of this buffer.
    for dj in range(KW):
        xs_ref[:, dj * Cin:(dj + 1) * Cin] = (
            x[:, dj:dj + W8, :].reshape(THp * W8, Cin))

    # KH MXU matmuls with the KW*Cin taps folded into the contraction dim.
    acc = None
    for di in range(KH):
        lhs = xs_ref[di * W8:di * W8 + TH * W8, :]         # aligned: addressing only
        part = jnp.dot(lhs, w_ref[di], preferred_element_type=jnp.float32)
        acc = part if acc is None else acc + part

    # Epilogue: bias + ReLU in fp32, single bf16 store.
    o_ref[0, 0] = jnp.maximum(acc + b_ref[...], 0.0).astype(o_ref.dtype)


# ----------------------------------------------------------------------------
# Wrapper: BN folding, layout/tiling, single pallas_call
# ----------------------------------------------------------------------------
def conv2d_block_forward(params, x_nchw, *, eps=1e-5, max_rows=64):
    w, b = params["w"], params["b"]
    gamma, beta = params["gamma"], params["beta"]
    mean, var = params["running_mean"], params["running_var"]

    Cout, Cin, KH, KW = w.shape
    N, C, H, W = x_nchw.shape
    assert C == Cin
    assert KH == KW and KH % 2 == 1, "odd square kernels only (module default k=3)"
    pad = (KH - 1) // 2

    # --- fold eval-mode BatchNorm into the conv weight / bias (fp32, host) ---
    scale = gamma / jnp.sqrt(var + eps)
    w_f = w * scale[:, None, None, None]
    b_f = (b - mean) * scale + beta

    # --- layout: NHWC, spatial halo pad, width aligned to the bf16 sublane tile ---
    # Channels are NOT padded in HBM; only a few zero columns keep in-kernel
    # reshapes layout-preserving (sliced off at the end, not silent).
    W8 = _round_up(W, 16)
    TH = _pick_row_tile(H, max_rows)
    nT = H // TH
    THp = TH + 2 * pad
    Wp = W8 + 2 * pad

    x = jnp.transpose(x_nchw, (0, 2, 3, 1)).astype(jnp.bfloat16)        # NHWC, bf16
    x = jnp.pad(x, ((0, 0), (pad, pad), (pad, W8 - W + pad), (0, 0)))
    # Row tiles with duplicated halo rows (overhead: 2*pad rows per tile).
    x_tiles = jnp.stack([x[:, t * TH: t * TH + THp] for t in range(nT)], axis=1)
    # (N, nT, THp, Wp, Cin)

    # Weights: OIHW -> (KH, KW, Cin, Cout) -> (KH, KW*Cin, Cout), bf16.
    w_taps = jnp.transpose(w_f, (2, 3, 1, 0)).reshape(KH, KW * Cin, Cout)
    w_taps = w_taps.astype(jnp.bfloat16)
    b_row = b_f.reshape(1, Cout).astype(jnp.float32)

    kernel = functools.partial(
        _conv_bn_relu_kernel,
        TH=TH, THp=THp, W8=W8, KH=KH, KW=KW, Cin=Cin, Cout=Cout)

    # VMEM budget from the actual block sizes (double-buffered ins/outs + scratch
    # + fp32 accumulator slack), with headroom; clamped to v7x-safe range.
    in_blk = _vmem_bytes((THp, Wp, Cin), jnp.bfloat16)
    out_blk = _vmem_bytes((TH * W8, Cout), jnp.bfloat16)
    w_blk = _vmem_bytes((KH, KW * Cin, Cout), jnp.bfloat16)
    b_blk = _vmem_bytes((1, Cout), jnp.float32)
    xs_blk = _vmem_bytes((THp * W8, KW * Cin), jnp.bfloat16)
    acc_blk = _vmem_bytes((TH * W8, Cout), jnp.float32)
    vmem_est = 2 * (in_blk + out_blk + w_blk + b_blk) + xs_blk + 4 * acc_blk
    vmem_limit = int(min(max(2 * vmem_est, 16 << 20), 64 << 20))

    flops = 2 * N * nT * TH * W8 * KH * KW * Cin * Cout
    bytes_accessed = (N * nT * THp * Wp * Cin * 2          # input tiles (bf16)
                      + KH * KW * Cin * Cout * 2 + Cout * 4  # weights + bias
                      + N * nT * TH * W8 * Cout * 2)        # output (bf16)

    out = pl.pallas_call(
        kernel,
        out_shape=jax.ShapeDtypeStruct((N, nT, TH * W8, Cout), jnp.bfloat16),
        grid=(N, nT),
        in_specs=[
            pl.BlockSpec((1, 1, THp, Wp, Cin), lambda n, t: (n, t, 0, 0, 0)),
            pl.BlockSpec((KH, KW * Cin, Cout), lambda n, t: (0, 0, 0)),
            pl.BlockSpec((1, Cout), lambda n, t: (0, 0)),
        ],
        out_specs=pl.BlockSpec((1, 1, TH * W8, Cout), lambda n, t: (n, t, 0, 0)),
        scratch_shapes=[pltpu.VMEM((THp * W8, KW * Cin), jnp.bfloat16)],
        compiler_params=pltpu.CompilerParams(
            dimension_semantics=("parallel", "parallel"),
            vmem_limit_bytes=vmem_limit,
        ),
        cost_estimate=pl.CostEstimate(
            flops=flops, transcendentals=0, bytes_accessed=bytes_accessed),
    )(x_tiles, w_taps, b_row)

    out = out.reshape(N, H, W8, Cout)[:, :, :W, :]
    # Dropout: identity (p=0 default / eval mode).
    return jnp.transpose(out, (0, 3, 1, 2)).astype(jnp.float32)   # back to NCHW fp32


# ----------------------------------------------------------------------------
# Deterministic synthetic parameters (conv + BN)
# ----------------------------------------------------------------------------
def init_params(key, cin, cout, k=3):
    kw_, kb_, kg_, kbt_, km_, kv_ = jax.random.split(key, 6)
    fan_in = cin * k * k
    return {
        "w": jax.random.normal(kw_, (cout, cin, k, k), jnp.float32) / jnp.sqrt(fan_in),
        "b": 0.02 * jax.random.normal(kb_, (cout,), jnp.float32),
        "gamma": 1.0 + 0.1 * jax.random.normal(kg_, (cout,), jnp.float32),
        "beta": 0.05 * jax.random.normal(kbt_, (cout,), jnp.float32),
        "running_mean": 0.1 * jax.random.normal(km_, (cout,), jnp.float32),
        "running_var": 1.0 + 0.1 * jax.random.uniform(kv_, (cout,), jnp.float32),
    }


if __name__ == "__main__":
    key = jax.random.PRNGKey(0)
    kx, kp = jax.random.split(key)
    N, Cin, H, W, Cout = 2, 4, 16, 16, 8
    x = jax.random.normal(kx, (N, Cin, H, W), jnp.float32)
    params = init_params(kp, Cin, Cout, k=3)

    y = conv2d_block_forward(params, x)
    jax.block_until_ready(y)
    assert y.shape == (N, Cout, H, W)

    # Reference: XLA conv on the SAME bf16 operands (BN folded), fp32 accumulate.
    eps = 1e-5
    scale = params["gamma"] / jnp.sqrt(params["running_var"] + eps)
    w_f = params["w"] * scale[:, None, None, None]
    b_f = (params["b"] - params["running_mean"]) * scale + params["beta"]
    x_nhwc = jnp.transpose(x, (0, 2, 3, 1)).astype(jnp.bfloat16)
    w_hwio = jnp.transpose(w_f, (2, 3, 1, 0)).astype(jnp.bfloat16)
    ref = jax.lax.conv_general_dilated(
        x_nhwc, w_hwio, window_strides=(1, 1), padding="SAME",
        dimension_numbers=("NHWC", "HWIO", "NHWC"),
        preferred_element_type=jnp.float32)
    ref = jnp.maximum(ref + b_f, 0.0)
    ref = jnp.transpose(ref, (0, 3, 1, 2))

    # Kernel stores bf16 (halves output HBM traffic) -> compare at bf16 precision.
    max_err = float(jnp.max(jnp.abs(y - ref)))
    assert jnp.allclose(y, ref, atol=2e-2, rtol=2e-2), max_err
    assert bool(jnp.all(y >= 0.0))  # ReLU non-negativity

    print("KERNEL_OK")
</pallas_src>

<mosaic_0001>
module attributes {stable_mosaic.version = 11 : i64} {
  func.func @_conv_bn_relu_kernel(%arg0: i32, %arg1: i32, %arg2: memref<1x1x18x18x4xbf16, #tpu.memory_space<vmem>>, %arg3: memref<3x12x8xbf16, #tpu.memory_space<vmem>>, %arg4: memref<1x8xf32, #tpu.memory_space<vmem>>, %arg5: memref<1x1x256x8xbf16, #tpu.memory_space<vmem>>, %arg6: memref<288x12xbf16, #tpu.memory_space<vmem>>) attributes {dimension_semantics = [#tpu.dimension_semantics<parallel>, #tpu.dimension_semantics<parallel>], iteration_bounds = array<i64: 2, 1>, scalar_prefetch = 0 : i64, scratch_operands = 1 : i64, tpu.core_type = #tpu.core_type<tc>, window_params = [{transform_indices = @transform_0, window_bounds = array<i64: 1, 1, 18, 18, 4>}, {pipeline_mode = #tpu.pipeline_mode<synchronous>, transform_indices = @transform_1, window_bounds = array<i64: 3, 12, 8>}, {pipeline_mode = #tpu.pipeline_mode<synchronous>, transform_indices = @transform_2, window_bounds = array<i64: 1, 8>}, {transform_indices = @transform_3, window_bounds = array<i64: 1, 1, 256, 8>}]} {
    %c0 = arith.constant 0 : index
    %c0_0 = arith.constant 0 : index
    %c0_1 = arith.constant 0 : index
    %c0_2 = arith.constant 0 : index
    %c0_3 = arith.constant 0 : index
    %0 = vector.load %arg2[%c0, %c0_0, %c0_1, %c0_2, %c0_3] : memref<1x1x18x18x4xbf16, #tpu.memory_space<vmem>>, vector<1x1x18x18x4xbf16>
    %1 = vector.shape_cast %0 : vector<1x1x18x18x4xbf16> to vector<18x18x4xbf16>
    %2 = vector.extract_strided_slice %1 {offsets = [0, 0, 0], sizes = [18, 16, 4], strides = [1, 1, 1]} : vector<18x18x4xbf16> to vector<18x16x4xbf16>
    %3 = vector.shape_cast %2 : vector<18x16x4xbf16> to vector<288x4xbf16>
    %c0_4 = arith.constant 0 : index
    %c0_5 = arith.constant 0 : index
    %4 = vector.load %arg6[%c0_4, %c0_5] : memref<288x12xbf16, #tpu.memory_space<vmem>>, vector<288x4xbf16>
    tpu.vector_store %arg6[%c0_4, %c0_5], %3 {strides = array<i32>} : memref<288x12xbf16, #tpu.memory_space<vmem>>, vector<288x4xbf16>,
    %5 = vector.extract_strided_slice %1 {offsets = [0, 1, 0], sizes = [18, 16, 4], strides = [1, 1, 1]} : vector<18x18x4xbf16> to vector<18x16x4xbf16>
    %6 = vector.shape_cast %5 : vector<18x16x4xbf16> to vector<288x4xbf16>
    %c0_6 = arith.constant 0 : index
    %c4 = arith.constant 4 : index
    %7 = vector.load %arg6[%c0_6, %c4] : memref<288x12xbf16, #tpu.memory_space<vmem>>, vector<288x4xbf16>
    tpu.vector_store %arg6[%c0_6, %c4], %6 {strides = array<i32>} : memref<288x12xbf16, #tpu.memory_space<vmem>>, vector<288x4xbf16>,
    %8 = vector.extract_strided_slice %1 {offsets = [0, 2, 0], sizes = [18, 16, 4], strides = [1, 1, 1]} : vector<18x18x4xbf16> to vector<18x16x4xbf16>
    %9 = vector.shape_cast %8 : vector<18x16x4xbf16> to vector<288x4xbf16>
    %c0_7 = arith.constant 0 : index
    %c8 = arith.constant 8 : index
    %10 = vector.load %arg6[%c0_7, %c8] : memref<288x12xbf16, #tpu.memory_space<vmem>>, vector<288x4xbf16>
    tpu.vector_store %arg6[%c0_7, %c8], %9 {strides = array<i32>} : memref<288x12xbf16, #tpu.memory_space<vmem>>, vector<288x4xbf16>,
    %c0_8 = arith.constant 0 : index
    %c0_9 = arith.constant 0 : index
    %11 = vector.load %arg6[%c0_8, %c0_9] : memref<288x12xbf16, #tpu.memory_space<vmem>>, vector<256x12xbf16>
    %c0_10 = arith.constant 0 : index
    %c0_11 = arith.constant 0 : index
    %c0_12 = arith.constant 0 : index
    %12 = vector.load %arg3[%c0_10, %c0_11, %c0_12] : memref<3x12x8xbf16, #tpu.memory_space<vmem>>, vector<1x12x8xbf16>
    %13 = vector.shape_cast %12 : vector<1x12x8xbf16> to vector<12x8xbf16>
    %cst = arith.constant dense<0.000000e+00> : vector<256x8xf32>
    %14 = tpu.matmul %11, %13, %cst {dimension_numbers = #tpu.dot_dimension_numbers<[1], [0], [0], [1], [0, 0, 1, 1], [], []>} : vector<256x12xbf16>, vector<12x8xbf16>, vector<256x8xf32> -> vector<256x8xf32>
    %c16 = arith.constant 16 : index
    %c0_13 = arith.constant 0 : index
    %15 = vector.load %arg6[%c16, %c0_13] : memref<288x12xbf16, #tpu.memory_space<vmem>>, vector<256x12xbf16>
    %c1 = arith.constant 1 : index
    %c0_14 = arith.constant 0 : index
    %c0_15 = arith.constant 0 : index
    %16 = vector.load %arg3[%c1, %c0_14, %c0_15] : memref<3x12x8xbf16, #tpu.memory_space<vmem>>, vector<1x12x8xbf16>
    %17 = vector.shape_cast %16 : vector<1x12x8xbf16> to vector<12x8xbf16>
    %cst_16 = arith.constant dense<0.000000e+00> : vector<256x8xf32>
    %18 = tpu.matmul %15, %17, %cst_16 {dimension_numbers = #tpu.dot_dimension_numbers<[1], [0], [0], [1], [0, 0, 1, 1], [], []>} : vector<256x12xbf16>, vector<12x8xbf16>, vector<256x8xf32> -> vector<256x8xf32>
    %19 = arith.addf %14, %18 : vector<256x8xf32>
    %c32 = arith.constant 32 : index
    %c0_17 = arith.constant 0 : index
    %20 = vector.load %arg6[%c32, %c0_17] : memref<288x12xbf16, #tpu.memory_space<vmem>>, vector<256x12xbf16>
    %c2 = arith.constant 2 : index
    %c0_18 = arith.constant 0 : index
    %c0_19 = arith.constant 0 : index
    %21 = vector.load %arg3[%c2, %c0_18, %c0_19] : memref<3x12x8xbf16, #tpu.memory_space<vmem>>, vector<1x12x8xbf16>
    %22 = vector.shape_cast %21 : vector<1x12x8xbf16> to vector<12x8xbf16>
    %cst_20 = arith.constant dense<0.000000e+00> : vector<256x8xf32>
    %23 = tpu.matmul %20, %22, %cst_20 {dimension_numbers = #tpu.dot_dimension_numbers<[1], [0], [0], [1], [0, 0, 1, 1], [], []>} : vector<256x12xbf16>, vector<12x8xbf16>, vector<256x8xf32> -> vector<256x8xf32>
    %24 = arith.addf %19, %23 : vector<256x8xf32>
    %c0_21 = arith.constant 0 : index
    %c0_22 = arith.constant 0 : index
    %25 = vector.load %arg4[%c0_21, %c0_22] : memref<1x8xf32, #tpu.memory_space<vmem>>, vector<1x8xf32>
    %26 = vector.broadcast %25 : vector<1x8xf32> to vector<256x8xf32>
    %27 = arith.addf %24, %26 : vector<256x8xf32>
    %cst_23 = arith.constant 0.000000e+00 : f32
    %28 = vector.broadcast %cst_23 : f32 to vector<256x8xf32>
    %29 = arith.maximumf %27, %28 : vector<256x8xf32>
    %30 = arith.truncf %29 : vector<256x8xf32> to vector<256x8xbf16>
    %c0_24 = arith.constant 0 : index
    %c0_25 = arith.constant 0 : index
    %c0_26 = arith.constant 0 : index
    %c0_27 = arith.constant 0 : index
    %31 = vector.load %arg5[%c0_24, %c0_25, %c0_26, %c0_27] : memref<1x1x256x8xbf16, #tpu.memory_space<vmem>>, vector<1x1x256x8xbf16>
    %32 = vector.shape_cast %31 : vector<1x1x256x8xbf16> to vector<256x8xbf16>
    %33 = vector.shape_cast %30 : vector<256x8xbf16> to vector<1x1x256x8xbf16>
    tpu.vector_store %arg5[%c0_24, %c0_25, %c0_26, %c0_27], %33 {strides = array<i32>} : memref<1x1x256x8xbf16, #tpu.memory_space<vmem>>, vector<1x1x256x8xbf16>,
    return
  }
  func.func @transform_0(%arg0: i32, %arg1: i32) -> (i32, i32, i32, i32, i32) {
    %c0_i32 = arith.constant 0 : i32
    %c0_i32_0 = arith.constant 0 : i32
    %c0_i32_1 = arith.constant 0 : i32
    %c0_i32_2 = arith.constant 0 : i32
    return %arg0, %arg1, %c0_i32, %c0_i32_0, %c0_i32_1 : i32, i32, i32, i32, i32
  }
  func.func @transform_1(%arg0: i32, %arg1: i32) -> (i32, i32, i32) {
    %c0_i32 = arith.constant 0 : i32
    %c0_i32_0 = arith.constant 0 : i32
    %c0_i32_1 = arith.constant 0 : i32
    %c0_i32_2 = arith.constant 0 : i32
    return %c0_i32, %c0_i32_0, %c0_i32_1 : i32, i32, i32
  }
  func.func @transform_2(%arg0: i32, %arg1: i32) -> (i32, i32) {
    %c0_i32 = arith.constant 0 : i32
    %c0_i32_0 = arith.constant 0 : i32
    %c0_i32_1 = arith.constant 0 : i32
    return %c0_i32, %c0_i32_0 : i32, i32
  }
  func.func @transform_3(%arg0: i32, %arg1: i32) -> (i32, i32, i32, i32) {
    %c0_i32 = arith.constant 0 : i32
    %c0_i32_0 = arith.constant 0 : i32
    %c0_i32_1 = arith.constant 0 : i32
    return %arg0, %arg1, %c0_i32, %c0_i32_0 : i32, i32, i32, i32
  }
}

</mosaic_0001>

<llo_original>
// kernel: tpu_custom_call.1
$region0: #{tpu_custom_call.1}
  #allocation0 [shape = 'u32[]', space=smem, size = 0x4, offset = 0x4, fixed_abs, tag = 'smem constant byte address 0x4 - core index']
  #allocation1 [shape = 'u32[144,128]{1,0:T(1,128)}', space=vmem, size = 0x12000, scoped, tag = 'internal scratch']
  #allocation2 [shape = 'bf16[288,12]{1,0:T(16,128)(2,1)}', space=vmem, size = 0x12000, scoped, tag = 'scratch operand']
  %s0 = inlined_call_operand.vmem [shape: bf16[2,1,18,18,4], index: 0, kind: input, shape index: {}]
  %s1 = inlined_call_operand.vmem [shape: bf16[3,12,8], index: 1, kind: input, shape index: {}]
  %s2 = inlined_call_operand.vmem [shape: f32[1,8], index: 2, kind: input, shape index: {}]
  %s3 = inlined_call_operand.vmem [shape: bf16[2,1,256,8], index: 3, kind: output, shape index: {}]
  %s4 = sld [smem:[#allocation0]]
  $region45: #{tpu_custom_call.1} parent=0
    _
  %s6 = ssub.s32 1, %s4
  %s7 = scalar_select 0, %s6, %s4
  loop: start=0, step=1, limit=4
  $region2: #{tpu_custom_call.1} parent=0 // loop_pre_header
    _
  $region3: #{tpu_custom_call.1} parent=0 // loop_header
    %s9 = sphi 0, %s13
    %p10 = scmp.ge.s32.totalorder %s9, 4
    %s16 = sphi 0, %s28
    %s17 = sphi 0, %s24
    %s18 = sphi 0, %s16
    %s19 = sphi 0, %s17
    %s20 = sphi 0, %s18
    %s21 = sphi 0, %s19
    %s33 = sphi 0, %s35
    %s36 = sphi 0, %s33
    %s37 = sphi 0, %s36
    %s53 = sphi 0, %s37
    %s57 = sphi 0, %s57
    %s59 = sphi 0, %s57
    %s60 = sphi 0, %s59
    %s74 = sphi 0, %s60
    %s78 = sphi 0, %s78
    %s80 = sphi 0, %s78
    %s81 = sphi 0, %s80
    %s95 = sphi 0, %s81
    %s103 = sphi 0, %s105
    %s106 = sphi 0, %s103
    %s107 = sphi 0, %s106
    %s123 = sphi 0, %s107
  $region4: #{tpu_custom_call.1} parent=0 // loop_header_branch
    %12 = sbr.rel (%p10) target = $region8
  $region5: #{tpu_custom_call.1} parent=0 // loop_body
    %s14 = ssub.s32 %s9, 1
    %s15 = ssub.s32 %s9, 2
    %s22 = sadd.s32 1, %s17
    %p23 = scmp.ge.s32.totalorder %s22, 1
    %s24 = scalar_select %p23, 0, %s22
    %s25 = sadd.s32 1, %s16
    %s26 = scalar_select %p23, %s25, %s16
    %p27 = scmp.ge.s32.totalorder %s26, 2
    %s28 = scalar_select %p27, 0, %s26
    %s29 = ssub.s32 %s16, %s28
    %s30 = ssub.s32 %s17, %s24
    %s31 = sor.u32 %s29, %s30
    %p32 = scmp.eq.s32.totalorder %s31, 0
    %s34 = sadd.s32 %s33, 1
    %s35 = scalar_select %p32, %s33, %s34
    %p38 = pneg %p32
    %p39 = scmp.eq.s32.totalorder %s9, 1
    %p40 = por %p38, %p39
    %p41 = scmp.ne.s32.totalorder %s33, %s36
    %p42 = scmp.eq.s32.totalorder %s9, 0
    %p43 = por %p41, %p42
    %p44 = scmp.ne.s32.totalorder %s33, %s36
    %p45 = scmp.eq.s32.totalorder %s14, 1
    %p46 = por %p44, %p45
    %p47 = scmp.ne.s32.totalorder %s36, %s37
    %p48 = scmp.eq.s32.totalorder %s14, 0
    %p49 = por %p47, %p48
    %p50 = scmp.ne.s32.totalorder %s36, %s37
    %p51 = scmp.eq.s32.totalorder %s15, 1
    %p52 = por %p50, %p51
    %p54 = scmp.ne.s32.totalorder %s37, %s53
    %p55 = scmp.eq.s32.totalorder %s15, 0
    %p56 = por %p54, %p55
    %s58 = sadd.s32 %s57, 1
    %p61 = scmp.eq.s32.totalorder %s9, 1
    %p62 = scmp.ne.s32.totalorder %s57, %s59
    %p63 = scmp.eq.s32.totalorder %s9, 0
    %p64 = por %p62, %p63
    %p65 = scmp.ne.s32.totalorder %s57, %s59
    %p66 = scmp.eq.s32.totalorder %s14, 1
    %p67 = por %p65, %p66
    %p68 = scmp.ne.s32.totalorder %s59, %s60
    %p69 = scmp.eq.s32.totalorder %s14, 0
    %p70 = por %p68, %p69
    %p71 = scmp.ne.s32.totalorder %s59, %s60
    %p72 = scmp.eq.s32.totalorder %s15, 1
    %p73 = por %p71, %p72
    %p75 = scmp.ne.s32.totalorder %s60, %s74
    %p76 = scmp.eq.s32.totalorder %s15, 0
    %p77 = por %p75, %p76
    %s79 = sadd.s32 %s78, 1
    %p82 = scmp.eq.s32.totalorder %s9, 1
    %p83 = scmp.ne.s32.totalorder %s78, %s80
    %p84 = scmp.eq.s32.totalorder %s9, 0
    %p85 = por %p83, %p84
    %p86 = scmp.ne.s32.totalorder %s78, %s80
    %p87 = scmp.eq.s32.totalorder %s14, 1
    %p88 = por %p86, %p87
    %p89 = scmp.ne.s32.totalorder %s80, %s81
    %p90 = scmp.eq.s32.totalorder %s14, 0
    %p91 = por %p89, %p90
    %p92 = scmp.ne.s32.totalorder %s80, %s81
    %p93 = scmp.eq.s32.totalorder %s15, 1
    %p94 = por %p92, %p93
    %p96 = scmp.ne.s32.totalorder %s81, %s95
    %p97 = scmp.eq.s32.totalorder %s15, 0
    %p98 = por %p96, %p97
    %s99 = ssub.s32 %s16, %s28
    %s100 = ssub.s32 %s17, %s24
    %s101 = sor.u32 %s99, %s100
    %p102 = scmp.eq.s32.totalorder %s101, 0
    %s104 = sadd.s32 %s103, 1
    %s105 = scalar_select %p102, %s103, %s104
    %p108 = pneg %p102
    %p109 = scmp.eq.s32.totalorder %s9, 1
    %p110 = por %p108, %p109
    %p111 = scmp.ne.s32.totalorder %s103, %s106
    %p112 = scmp.eq.s32.totalorder %s9, 0
    %p113 = por %p111, %p112
    %p114 = scmp.ne.s32.totalorder %s103, %s106
    %p115 = scmp.eq.s32.totalorder %s14, 1
    %p116 = por %p114, %p115
    %p117 = scmp.ne.s32.totalorder %s106, %s107
    %p118 = scmp.eq.s32.totalorder %s14, 0
    %p119 = por %p117, %p118
    %p120 = scmp.ne.s32.totalorder %s106, %s107
    %p121 = scmp.eq.s32.totalorder %s15, 1
    %p122 = por %p120, %p121
    %p124 = scmp.ne.s32.totalorder %s107, %s123
    %p125 = scmp.eq.s32.totalorder %s15, 0
    %p126 = por %p124, %p125
    %p127 = scmp.le.s32.totalorder 1, %s9
    %p128 = scmp.lt.s32.totalorder %s9, 3
    %p129 = pnand %p127, %p128
    %p130 = pneg %p129
    // Predicated region
    $region9: #{tpu_custom_call.1} parent=5 // pred_check
      _
    $region10: #{tpu_custom_call.1} parent=5 // pred_check_branch
      %132 = sbr.rel (%p129) target = $region12
    $region11: #{tpu_custom_call.1} parent=5 // pred_region
      %s133 = ssub.s32 %s9, 1
      // Predicated region
      $region13: #{tpu_custom_call.1} parent=11 // pred_check
        %p134 = pneg %p70
      $region14: #{tpu_custom_call.1} parent=11 // pred_check_branch
        %136 = sbr.rel (%p134) target = $region16
      $region15: #{tpu_custom_call.1} parent=11 // pred_region
        _
      $region16: #{tpu_custom_call.1} parent=11 // pred_fallthru
        _
      // Predicated region
      $region17: #{tpu_custom_call.1} parent=11 // pred_check
        %p137 = pneg %p91
      $region18: #{tpu_custom_call.1} parent=11 // pred_check_branch
        %139 = sbr.rel (%p137) target = $region20
      $region19: #{tpu_custom_call.1} parent=11 // pred_region
        _
      $region20: #{tpu_custom_call.1} parent=11 // pred_fallthru
        _
    $region12: #{tpu_custom_call.1} parent=5 // pred_fallthru
      _
    %p140 = scmp.lt.s32.totalorder %s9, 2
    // Predicated region
    $region21: #{tpu_custom_call.1} parent=5 // pred_check
      %p141 = pneg %p140
    $region22: #{tpu_custom_call.1} parent=5 // pred_check_branch
      %143 = sbr.rel (%p141) target = $region24
    $region23: #{tpu_custom_call.1} parent=5 // pred_region
      // Predicated region
      $region25: #{tpu_custom_call.1} parent=23 // pred_check
        %p144 = pneg %p43
      $region26: #{tpu_custom_call.1} parent=23 // pred_check_branch
        %146 = sbr.rel (%p144) target = $region28
      $region27: #{tpu_custom_call.1} parent=23 // pred_region
        %p147 = scmp.lt.s32.totalorder %s16, 1
        %s148 = scalar_select %p147, %s16, 1
        %p149 = scmp.lt.s32.totalorder %s17, 0
        %s150 = scalar_select %p149, %s17, 0
        %s151 = smul.addr %s150, 54
        %s152 = smul.addr %s148, 54
        %s153 = sadd.s32 %s151, %s152
        %s154 = smul.addr %s153, 4
        %s155 = scalar_lea.vmem %s0, %s154
      $region28: #{tpu_custom_call.1} parent=23 // pred_fallthru
        _
    $region24: #{tpu_custom_call.1} parent=5 // pred_fallthru
      _
    %p156 = scmp.le.s32.totalorder 1, %s9
    %p157 = scmp.lt.s32.totalorder %s9, 3
    %p158 = pnand %p156, %p157
    %p159 = pneg %p158
    // Predicated region
    $region29: #{tpu_custom_call.1} parent=5 // pred_check
      _
    $region30: #{tpu_custom_call.1} parent=5 // pred_check_branch
      %161 = sbr.rel (%p158) target = $region32
    $region31: #{tpu_custom_call.1} parent=5 // pred_region
      %s162 = ssub.s32 %s9, 1
      %p163 = scmp.lt.s32.totalorder %s18, 1
      %s164 = scalar_select %p163, %s18, 1
      %p165 = scmp.lt.s32.totalorder %s19, 0
      %s166 = scalar_select %p165, %s19, 0
      %s167 = smul.addr %s166, 54
      %s168 = smul.addr %s164, 54
      %s169 = sadd.s32 %s167, %s168
      %s170 = smul.addr %s169, 4
      %s171 = scalar_lea.vmem %s0, %s170
      %p172 = pneg %p49
      %p173 = pneg %p46
      %p174 = pneg %p70
      %p175 = pneg %p67
      %p176 = pneg %p91
      %p177 = pneg %p88
      %p178 = pneg %p119
      %p179 = pneg %p116
      %p180 = scmp.lt.s32.totalorder %s18, 1
      %s181 = scalar_select %p180, %s18, 1
      %p182 = scmp.lt.s32.totalorder %s19, 0
      %s183 = scalar_select %p182, %s19, 0
      %s184 = smul.addr %s183, 32
      %s185 = smul.addr %s181, 32
      %s186 = sadd.s32 %s184, %s185
      %s187 = smul.addr %s186, 4
      %s188 = scalar_lea.vmem %s3, %s187
      %p189 = scmp.lt.s32.totalorder %s18, 1
      %s190 = scalar_select %p189, %s18, 1
      %p191 = scmp.lt.s32.totalorder %s19, 0
      %s192 = scalar_select %p191, %s19, 0
      %s193 = smul.addr %s192, 54
      %s194 = smul.addr %s190, 54
      %s195 = sadd.s32 %s193, %s194
      %s196 = smul.addr %s195, 4
      %s197 = scalar_lea.vmem %s0, %s196
      %p198 = scmp.lt.s32.totalorder %s18, 1
      %s199 = scalar_select %p198, %s18, 1
      %p200 = scmp.lt.s32.totalorder %s19, 0
      %s201 = scalar_select %p200, %s19, 0
      %s202 = smul.addr %s201, 32
      %s203 = smul.addr %s199, 32
      %s204 = sadd.s32 %s202, %s203
      %s205 = smul.addr %s204, 4
      %s206 = scalar_lea.vmem %s3, %s205
      %v208 = vld [vmem:[%s197] sm:$0xf]
      %v209 = vld [vmem:[%s197 + $0x4] sm:$0xf]
      %v210 = vld [vmem:[%s197 + $0x8] sm:$0x1]
      %v211 = vld [vmem:[%s197 + $0xc] sm:$0xf]
      %v212 = vld [vmem:[%s197 + $0x10] sm:$0xf]
      %v213 = vld [vmem:[%s197 + $0x14] sm:$0x1]
      %v214 = vld [vmem:[%s197 + $0x18] sm:$0xf]
      %v215 = vld [vmem:[%s197 + $0x1c] sm:$0xf]
      %v216 = vld [vmem:[%s197 + $0x20] sm:$0x1]
      %v217 = vld [vmem:[%s197 + $0x24] sm:$0xf]
      %v218 = vld [vmem:[%s197 + $0x28] sm:$0xf]
      %v219 = vld [vmem:[%s197 + $0x2c] sm:$0x1]
      %v220 = vld [vmem:[%s197 + $0x30] sm:$0xf]
      %v221 = vld [vmem:[%s197 + $0x34] sm:$0xf]
      %v222 = vld [vmem:[%s197 + $0x38] sm:$0x1]
      %v223 = vld [vmem:[%s197 + $0x3c] sm:$0xf]
      %v224 = vld [vmem:[%s197 + $0x40] sm:$0xf]
      %v225 = vld [vmem:[%s197 + $0x44] sm:$0x1]
      %v226 = vld [vmem:[%s197 + $0x48] sm:$0xf]
      %v227 = vld [vmem:[%s197 + $0x4c] sm:$0xf]
      %v228 = vld [vmem:[%s197 + $0x50] sm:$0x1]
      %v229 = vld [vmem:[%s197 + $0x54] sm:$0xf]
      %v230 = vld [vmem:[%s197 + $0x58] sm:$0xf]
      %v231 = vld [vmem:[%s197 + $0x5c] sm:$0x1]
      %v232 = vld [vmem:[%s197 + $0x60] sm:$0xf]
      %v233 = vld [vmem:[%s197 + $0x64] sm:$0xf]
      %v234 = vld [vmem:[%s197 + $0x68] sm:$0x1]
      %v235 = vld [vmem:[%s197 + $0x6c] sm:$0xf]
      %v236 = vld [vmem:[%s197 + $0x70] sm:$0xf]
      %v237 = vld [vmem:[%s197 + $0x74] sm:$0x1]
      %v238 = vld [vmem:[%s197 + $0x78] sm:$0xf]
      %v239 = vld [vmem:[%s197 + $0x7c] sm:$0xf]
      %v240 = vld [vmem:[%s197 + $0x80] sm:$0x1]
      %v241 = vld [vmem:[%s197 + $0x84] sm:$0xf]
      %v242 = vld [vmem:[%s197 + $0x88] sm:$0xf]
      %v243 = vld [vmem:[%s197 + $0x8c] sm:$0x1]
      %v244 = vld [vmem:[%s197 + $0x90] sm:$0xf]
      %v245 = vld [vmem:[%s197 + $0x94] sm:$0xf]
      %v246 = vld [vmem:[%s197 + $0x98] sm:$0x1]
      %v247 = vld [vmem:[%s197 + $0x9c] sm:$0xf]
      %v248 = vld [vmem:[%s197 + $0xa0] sm:$0xf]
      %v249 = vld [vmem:[%s197 + $0xa4] sm:$0x1]
      %v250 = vld [vmem:[%s197 + $0xa8] sm:$0xf]
      %v251 = vld [vmem:[%s197 + $0xac] sm:$0xf]
      %v252 = vld [vmem:[%s197 + $0xb0] sm:$0x1]
      %v253 = vld [vmem:[%s197 + $0xb4] sm:$0xf]
      %v254 = vld [vmem:[%s197 + $0xb8] sm:$0xf]
      %v255 = vld [vmem:[%s197 + $0xbc] sm:$0x1]
      %v256 = vld [vmem:[%s197 + $0xc0] sm:$0xf]
      %v257 = vld [vmem:[%s197 + $0xc4] sm:$0xf]
      %v258 = vld [vmem:[%s197 + $0xc8] sm:$0x1]
      %v259 = vld [vmem:[%s197 + $0xcc] sm:$0xf]
      %v260 = vld [vmem:[%s197 + $0xd0] sm:$0xf]
      %v261 = vld [vmem:[%s197 + $0xd4] sm:$0x1]
      %v298 = vunpack.c.l.b16 %v208
      %v299 = vunpack.c.l.b16 %v209
      %v300 = vunpack.c.l.b16 %v211
      %v301 = vunpack.c.l.b16 %v212
      %v302 = vunpack.c.l.b16 %v214
      %v303 = vunpack.c.l.b16 %v215
      %v304 = vunpack.c.l.b16 %v217
      %v305 = vunpack.c.l.b16 %v218
      %v306 = vunpack.c.l.b16 %v220
      %v307 = vunpack.c.l.b16 %v221
      %v308 = vunpack.c.l.b16 %v223
      %v309 = vunpack.c.l.b16 %v224
      %v310 = vunpack.c.l.b16 %v226
      %v311 = vunpack.c.l.b16 %v227
      %v312 = vunpack.c.l.b16 %v229
      %v313 = vunpack.c.l.b16 %v230
      %v314 = vunpack.c.l.b16 %v232
      %v315 = vunpack.c.l.b16 %v233
      %v316 = vunpack.c.l.b16 %v235
      %v317 = vunpack.c.l.b16 %v236
      %v318 = vunpack.c.l.b16 %v238
      %v319 = vunpack.c.l.b16 %v239
      %v320 = vunpack.c.l.b16 %v241
      %v321 = vunpack.c.l.b16 %v242
      %v322 = vunpack.c.l.b16 %v244
      %v323 = vunpack.c.l.b16 %v245
      %v324 = vunpack.c.l.b16 %v247
      %v325 = vunpack.c.l.b16 %v248
      %v326 = vunpack.c.l.b16 %v250
      %v327 = vunpack.c.l.b16 %v251
      %v328 = vunpack.c.l.b16 %v253
      %v329 = vunpack.c.l.b16 %v254
      %v330 = vunpack.c.l.b16 %v256
      %v331 = vunpack.c.l.b16 %v257
      %v332 = vunpack.c.l.b16 %v259
      %v333 = vunpack.c.l.b16 %v260
      %v334 = vpack.c.b16 %v299, %v298
      %v335 = vpack.c.b16 %v301, %v300
      %v336 = vpack.c.b16 %v303, %v302
      %v337 = vpack.c.b16 %v305, %v304
      %v338 = vpack.c.b16 %v307, %v306
      %v339 = vpack.c.b16 %v309, %v308
      %v340 = vpack.c.b16 %v311, %v310
      %v341 = vpack.c.b16 %v313, %v312
      %v342 = vpack.c.b16 %v315, %v314
      %v343 = vpack.c.b16 %v317, %v316
      %v344 = vpack.c.b16 %v319, %v318
      %v345 = vpack.c.b16 %v321, %v320
      %v346 = vpack.c.b16 %v323, %v322
      %v347 = vpack.c.b16 %v325, %v324
      %v348 = vpack.c.b16 %v327, %v326
      %v349 = vpack.c.b16 %v329, %v328
      %v350 = vpack.c.b16 %v331, %v330
      %v351 = vpack.c.b16 %v333, %v332
      %vm370 = vcmask 31744
      %371 = vst.msk [vmem:[#allocation2] sm:$0xff] %vm370, %v334
      %372 = vst.msk [vmem:[#allocation2 + $0x8] sm:$0xff] %vm370, %v335
      %373 = vst.msk [vmem:[#allocation2 + $0x10] sm:$0xff] %vm370, %v336
      %374 = vst.msk [vmem:[#allocation2 + $0x18] sm:$0xff] %vm370, %v337
      %375 = vst.msk [vmem:[#allocation2 + $0x20] sm:$0xff] %vm370, %v338
      %376 = vst.msk [vmem:[#allocation2 + $0x28] sm:$0xff] %vm370, %v339
      %377 = vst.msk [vmem:[#allocation2 + $0x30] sm:$0xff] %vm370, %v340
      %378 = vst.msk [vmem:[#allocation2 + $0x38] sm:$0xff] %vm370, %v341
      %379 = vst.msk [vmem:[#allocation2 + $0x40] sm:$0xff] %vm370, %v342
      %380 = vst.msk [vmem:[#allocation2 + $0x48] sm:$0xff] %vm370, %v343
      %381 = vst.msk [vmem:[#allocation2 + $0x50] sm:$0xff] %vm370, %v344
      %382 = vst.msk [vmem:[#allocation2 + $0x58] sm:$0xff] %vm370, %v345
      %383 = vst.msk [vmem:[#allocation2 + $0x60] sm:$0xff] %vm370, %v346
      %384 = vst.msk [vmem:[#allocation2 + $0x68] sm:$0xff] %vm370, %v347
      %385 = vst.msk [vmem:[#allocation2 + $0x70] sm:$0xff] %vm370, %v348
      %386 = vst.msk [vmem:[#allocation2 + $0x78] sm:$0xff] %vm370, %v349
      %387 = vst.msk [vmem:[#allocation2 + $0x80] sm:$0xff] %vm370, %v350
      %388 = vst.msk [vmem:[#allocation2 + $0x88] sm:$0xff] %vm370, %v351
      %vm389 = vsmask.f32 3328
      %vm390 = vsmask.f32 7440
      %vm391 = vmor %vm389, %vm390
      %v393 = vshrl.u32 %v208, 16
      %v395 = vrot.slane %v393, 4
      %v396 = vshll.u32 %v208, 16
      %v398 = vrot.slane %v396, 5
      %v399 = vor.u32 %v395, %v398
      %v400 = vrot.slane %v399, 4
      %v402 = vshll.u32 %v209, 16
      %v404 = vrot.slane %v402, 5
      %v405 = vsel %vm391, %v400, %v404
      %v406 = vshrl.u32 %v209, 16
      %v408 = vrot.slane %v406, 4
      %v409 = vor.u32 %v408, %v404
      %v410 = vrot.slane %v409, 4
      %v412 = vshll.u32 %v210, 16
      %v414 = vrot.slane %v412, 5
      %v415 = vsel %vm391, %v410, %v414
      %v417 = vshrl.u32 %v211, 16
      %v419 = vrot.slane %v417, 4
      %v420 = vshll.u32 %v211, 16
      %v422 = vrot.slane %v420, 5
      %v423 = vor.u32 %v419, %v422
      %v424 = vrot.slane %v423, 4
      %v426 = vshll.u32 %v212, 16
      %v428 = vrot.slane %v426, 5
      %v429 = vsel %vm391, %v424, %v428
      %v430 = vshrl.u32 %v212, 16
      %v432 = vrot.slane %v430, 4
      %v433 = vor.u32 %v432, %v428
      %v434 = vrot.slane %v433, 4
      %v436 = vshll.u32 %v213, 16
      %v438 = vrot.slane %v436, 5
      %v439 = vsel %vm391, %v434, %v438
      %v441 = vshrl.u32 %v214, 16
      %v443 = vrot.slane %v441, 4
      %v444 = vshll.u32 %v214, 16
      %v446 = vrot.slane %v444, 5
      %v447 = vor.u32 %v443, %v446
      %v448 = vrot.slane %v447, 4
      %v450 = vshll.u32 %v215, 16
      %v452 = vrot.slane %v450, 5
      %v453 = vsel %vm391, %v448, %v452
      %v454 = vshrl.u32 %v215, 16
      %v456 = vrot.slane %v454, 4
      %v457 = vor.u32 %v456, %v452
      %v458 = vrot.slane %v457, 4
      %v460 = vshll.u32 %v216, 16
      %v462 = vrot.slane %v460, 5
      %v463 = vsel %vm391, %v458, %v462
      %v465 = vshrl.u32 %v217, 16
      %v467 = vrot.slane %v465, 4
      %v468 = vshll.u32 %v217, 16
      %v470 = vrot.slane %v468, 5
      %v471 = vor.u32 %v467, %v470
      %v472 = vrot.slane %v471, 4
      %v474 = vshll.u32 %v218, 16
      %v476 = vrot.slane %v474, 5
      %v477 = vsel %vm391, %v472, %v476
      %v478 = vshrl.u32 %v218, 16
      %v480 = vrot.slane %v478, 4
      %v481 = vor.u32 %v480, %v476
      %v482 = vrot.slane %v481, 4
      %v484 = vshll.u32 %v219, 16
      %v486 = vrot.slane %v484, 5
      %v487 = vsel %vm391, %v482, %v486
      %v489 = vshrl.u32 %v220, 16
      %v491 = vrot.slane %v489, 4
      %v492 = vshll.u32 %v220, 16
      %v494 = vrot.slane %v492, 5
      %v495 = vor.u32 %v491, %v494
      %v496 = vrot.slane %v495, 4
      %v498 = vshll.u32 %v221, 16
      %v500 = vrot.slane %v498, 5
      %v501 = vsel %vm391, %v496, %v500
      %v502 = vshrl.u32 %v221, 16
      %v504 = vrot.slane %v502, 4
      %v505 = vor.u32 %v504, %v500
      %v506 = vrot.slane %v505, 4
      %v508 = vshll.u32 %v222, 16
      %v510 = vrot.slane %v508, 5
      %v511 = vsel %vm391, %v506, %v510
      %v513 = vshrl.u32 %v223, 16
      %v515 = vrot.slane %v513, 4
      %v516 = vshll.u32 %v223, 16
      %v518 = vrot.slane %v516, 5
      %v519 = vor.u32 %v515, %v518
      %v520 = vrot.slane %v519, 4
      %v522 = vshll.u32 %v224, 16
      %v524 = vrot.slane %v522, 5
      %v525 = vsel %vm391, %v520, %v524
      %v526 = vshrl.u32 %v224, 16
      %v528 = vrot.slane %v526, 4
      %v529 = vor.u32 %v528, %v524
      %v530 = vrot.slane %v529, 4
      %v532 = vshll.u32 %v225, 16
      %v534 = vrot.slane %v532, 5
      %v535 = vsel %vm391, %v530, %v534
      %v537 = vshrl.u32 %v226, 16
      %v539 = vrot.slane %v537, 4
      %v540 = vshll.u32 %v226, 16
      %v542 = vrot.slane %v540, 5
      %v543 = vor.u32 %v539, %v542
      %v544 = vrot.slane %v543, 4
      %v546 = vshll.u32 %v227, 16
      %v548 = vrot.slane %v546, 5
      %v549 = vsel %vm391, %v544, %v548
      %v550 = vshrl.u32 %v227, 16
      %v552 = vrot.slane %v550, 4
      %v553 = vor.u32 %v552, %v548
      %v554 = vrot.slane %v553, 4
      %v556 = vshll.u32 %v228, 16
      %v558 = vrot.slane %v556, 5
      %v559 = vsel %vm391, %v554, %v558
      %v561 = vshrl.u32 %v229, 16
      %v563 = vrot.slane %v561, 4
      %v564 = vshll.u32 %v229, 16
      %v566 = vrot.slane %v564, 5
      %v567 = vor.u32 %v563, %v566
      %v568 = vrot.slane %v567, 4
      %v570 = vshll.u32 %v230, 16
      %v572 = vrot.slane %v570, 5
      %v573 = vsel %vm391, %v568, %v572
      %v574 = vshrl.u32 %v230, 16
      %v576 = vrot.slane %v574, 4
      %v577 = vor.u32 %v576, %v572
      %v578 = vrot.slane %v577, 4
      %v580 = vshll.u32 %v231, 16
      %v582 = vrot.slane %v580, 5
      %v583 = vsel %vm391, %v578, %v582
      %v585 = vshrl.u32 %v232, 16
      %v587 = vrot.slane %v585, 4
      %v588 = vshll.u32 %v232, 16
      %v590 = vrot.slane %v588, 5
      %v591 = vor.u32 %v587, %v590
      %v592 = vrot.slane %v591, 4
      %v594 = vshll.u32 %v233, 16
      %v596 = vrot.slane %v594, 5
      %v597 = vsel %vm391, %v592, %v596
      %v598 = vshrl.u32 %v233, 16
      %v600 = vrot.slane %v598, 4
      %v601 = vor.u32 %v600, %v596
      %v602 = vrot.slane %v601, 4
      %v604 = vshll.u32 %v234, 16
      %v606 = vrot.slane %v604, 5
      %v607 = vsel %vm391, %v602, %v606
      %v609 = vshrl.u32 %v235, 16
      %v611 = vrot.slane %v609, 4
      %v612 = vshll.u32 %v235, 16
      %v614 = vrot.slane %v612, 5
      %v615 = vor.u32 %v611, %v614
      %v616 = vrot.slane %v615, 4
      %v618 = vshll.u32 %v236, 16
      %v620 = vrot.slane %v618, 5
      %v621 = vsel %vm391, %v616, %v620
      %v622 = vshrl.u32 %v236, 16
      %v624 = vrot.slane %v622, 4
      %v625 = vor.u32 %v624, %v620
      %v626 = vrot.slane %v625, 4
      %v628 = vshll.u32 %v237, 16
      %v630 = vrot.slane %v628, 5
      %v631 = vsel %vm391, %v626, %v630
      %v633 = vshrl.u32 %v238, 16
      %v635 = vrot.slane %v633, 4
      %v636 = vshll.u32 %v238, 16
      %v638 = vrot.slane %v636, 5
      %v639 = vor.u32 %v635, %v638
      %v640 = vrot.slane %v639, 4
      %v642 = vshll.u32 %v239, 16
      %v644 = vrot.slane %v642, 5
      %v645 = vsel %vm391, %v640, %v644
      %v646 = vshrl.u32 %v239, 16
      %v648 = vrot.slane %v646, 4
      %v649 = vor.u32 %v648, %v644
      %v650 = vrot.slane %v649, 4
      %v652 = vshll.u32 %v240, 16
      %v654 = vrot.slane %v652, 5
      %v655 = vsel %vm391, %v650, %v654
      %v657 = vshrl.u32 %v241, 16
      %v659 = vrot.slane %v657, 4
      %v660 = vshll.u32 %v241, 16
      %v662 = vrot.slane %v660, 5
      %v663 = vor.u32 %v659, %v662
      %v664 = vrot.slane %v663, 4
      %v666 = vshll.u32 %v242, 16
      %v668 = vrot.slane %v666, 5
      %v669 = vsel %vm391, %v664, %v668
      %v670 = vshrl.u32 %v242, 16
      %v672 = vrot.slane %v670, 4
      %v673 = vor.u32 %v672, %v668
      %v674 = vrot.slane %v673, 4
      %v676 = vshll.u32 %v243, 16
      %v678 = vrot.slane %v676, 5
      %v679 = vsel %vm391, %v674, %v678
      %v681 = vshrl.u32 %v244, 16
      %v683 = vrot.slane %v681, 4
      %v684 = vshll.u32 %v244, 16
      %v686 = vrot.slane %v684, 5
      %v687 = vor.u32 %v683, %v686
      %v688 = vrot.slane %v687, 4
      %v690 = vshll.u32 %v245, 16
      %v692 = vrot.slane %v690, 5
      %v693 = vsel %vm391, %v688, %v692
      %v694 = vshrl.u32 %v245, 16
      %v696 = vrot.slane %v694, 4
      %v697 = vor.u32 %v696, %v692
      %v698 = vrot.slane %v697, 4
      %v700 = vshll.u32 %v246, 16
      %v702 = vrot.slane %v700, 5
      %v703 = vsel %vm391, %v698, %v702
      %v705 = vshrl.u32 %v247, 16
      %v707 = vrot.slane %v705, 4
      %v708 = vshll.u32 %v247, 16
      %v710 = vrot.slane %v708, 5
      %v711 = vor.u32 %v707, %v710
      %v712 = vrot.slane %v711, 4
      %v714 = vshll.u32 %v248, 16
      %v716 = vrot.slane %v714, 5
      %v717 = vsel %vm391, %v712, %v716
      %v718 = vshrl.u32 %v248, 16
      %v720 = vrot.slane %v718, 4
      %v721 = vor.u32 %v720, %v716
      %v722 = vrot.slane %v721, 4
      %v724 = vshll.u32 %v249, 16
      %v726 = vrot.slane %v724, 5
      %v727 = vsel %vm391, %v722, %v726
      %v729 = vshrl.u32 %v250, 16
      %v731 = vrot.slane %v729, 4
      %v732 = vshll.u32 %v250, 16
      %v734 = vrot.slane %v732, 5
      %v735 = vor.u32 %v731, %v734
      %v736 = vrot.slane %v735, 4
      %v738 = vshll.u32 %v251, 16
      %v740 = vrot.slane %v738, 5
      %v741 = vsel %vm391, %v736, %v740
      %v742 = vshrl.u32 %v251, 16
      %v744 = vrot.slane %v742, 4
      %v745 = vor.u32 %v744, %v740
      %v746 = vrot.slane %v745, 4
      %v748 = vshll.u32 %v252, 16
      %v750 = vrot.slane %v748, 5
      %v751 = vsel %vm391, %v746, %v750
      %v753 = vshrl.u32 %v253, 16
      %v755 = vrot.slane %v753, 4
      %v756 = vshll.u32 %v253, 16
      %v758 = vrot.slane %v756, 5
      %v759 = vor.u32 %v755, %v758
      %v760 = vrot.slane %v759, 4
      %v762 = vshll.u32 %v254, 16
      %v764 = vrot.slane %v762, 5
      %v765 = vsel %vm391, %v760, %v764
      %v766 = vshrl.u32 %v254, 16
      %v768 = vrot.slane %v766, 4
      %v769 = vor.u32 %v768, %v764
      %v770 = vrot.slane %v769, 4
      %v772 = vshll.u32 %v255, 16
      %v774 = vrot.slane %v772, 5
      %v775 = vsel %vm391, %v770, %v774
      %v777 = vshrl.u32 %v256, 16
      %v779 = vrot.slane %v777, 4
      %v780 = vshll.u32 %v256, 16
      %v782 = vrot.slane %v780, 5
      %v783 = vor.u32 %v779, %v782
      %v784 = vrot.slane %v783, 4
      %v786 = vshll.u32 %v257, 16
      %v788 = vrot.slane %v786, 5
      %v789 = vsel %vm391, %v784, %v788
      %v790 = vshrl.u32 %v257, 16
      %v792 = vrot.slane %v790, 4
      %v793 = vor.u32 %v792, %v788
      %v794 = vrot.slane %v793, 4
      %v796 = vshll.u32 %v258, 16
      %v798 = vrot.slane %v796, 5
      %v799 = vsel %vm391, %v794, %v798
      %v801 = vshrl.u32 %v259, 16
      %v803 = vrot.slane %v801, 4
      %v804 = vshll.u32 %v259, 16
      %v806 = vrot.slane %v804, 5
      %v807 = vor.u32 %v803, %v806
      %v808 = vrot.slane %v807, 4
      %v810 = vshll.u32 %v260, 16
      %v812 = vrot.slane %v810, 5
      %v813 = vsel %vm391, %v808, %v812
      %v814 = vshrl.u32 %v260, 16
      %v816 = vrot.slane %v814, 4
      %v817 = vor.u32 %v816, %v812
      %v818 = vrot.slane %v817, 4
      %v820 = vshll.u32 %v261, 16
      %v822 = vrot.slane %v820, 5
      %v823 = vsel %vm391, %v818, %v822
      %v824 = vunpack.c.l.b16 %v405
      %v825 = vunpack.c.l.b16 %v415
      %v826 = vunpack.c.l.b16 %v429
      %v827 = vunpack.c.l.b16 %v439
      %v828 = vunpack.c.l.b16 %v453
      %v829 = vunpack.c.l.b16 %v463
      %v830 = vunpack.c.l.b16 %v477
      %v831 = vunpack.c.l.b16 %v487
      %v832 = vunpack.c.l.b16 %v501
      %v833 = vunpack.c.l.b16 %v511
      %v834 = vunpack.c.l.b16 %v525
      %v835 = vunpack.c.l.b16 %v535
      %v836 = vunpack.c.l.b16 %v549
      %v837 = vunpack.c.l.b16 %v559
      %v838 = vunpack.c.l.b16 %v573
      %v839 = vunpack.c.l.b16 %v583
      %v840 = vunpack.c.l.b16 %v597
      %v841 = vunpack.c.l.b16 %v607
      %v842 = vunpack.c.l.b16 %v621
      %v843 = vunpack.c.l.b16 %v631
      %v844 = vunpack.c.l.b16 %v645
      %v845 = vunpack.c.l.b16 %v655
      %v846 = vunpack.c.l.b16 %v669
      %v847 = vunpack.c.l.b16 %v679
      %v848 = vunpack.c.l.b16 %v693
      %v849 = vunpack.c.l.b16 %v703
      %v850 = vunpack.c.l.b16 %v717
      %v851 = vunpack.c.l.b16 %v727
      %v852 = vunpack.c.l.b16 %v741
      %v853 = vunpack.c.l.b16 %v751
      %v854 = vunpack.c.l.b16 %v765
      %v855 = vunpack.c.l.b16 %v775
      %v856 = vunpack.c.l.b16 %v789
      %v857 = vunpack.c.l.b16 %v799
      %v858 = vunpack.c.l.b16 %v813
      %v859 = vunpack.c.l.b16 %v823
      %v860 = vpack.c.b16 %v825, %v824
      %v861 = vpack.c.b16 %v827, %v826
      %v862 = vpack.c.b16 %v829, %v828
      %v863 = vpack.c.b16 %v831, %v830
      %v864 = vpack.c.b16 %v833, %v832
      %v865 = vpack.c.b16 %v835, %v834
      %v866 = vpack.c.b16 %v837, %v836
      %v867 = vpack.c.b16 %v839, %v838
      %v868 = vpack.c.b16 %v841, %v840
      %v869 = vpack.c.b16 %v843, %v842
      %v870 = vpack.c.b16 %v845, %v844
      %v871 = vpack.c.b16 %v847, %v846
      %v872 = vpack.c.b16 %v849, %v848
      %v873 = vpack.c.b16 %v851, %v850
      %v874 = vpack.c.b16 %v853, %v852
      %v875 = vpack.c.b16 %v855, %v854
      %v876 = vpack.c.b16 %v857, %v856
      %v877 = vpack.c.b16 %v859, %v858
      %878 = vrot.lane.b32.xlu0 %v860, 4
      %v879 = vpop.permute.xlu0 %878
      %880 = vrot.lane.b32.xlu0 %v861, 4
      %v881 = vpop.permute.xlu0 %880
      %882 = vrot.lane.b32.xlu0 %v862, 4
      %v883 = vpop.permute.xlu0 %882
      %884 = vrot.lane.b32.xlu0 %v863, 4
      %v885 = vpop.permute.xlu0 %884
      %886 = vrot.lane.b32.xlu0 %v864, 4
      %v887 = vpop.permute.xlu0 %886
      %888 = vrot.lane.b32.xlu0 %v865, 4
      %v889 = vpop.permute.xlu0 %888
      %890 = vrot.lane.b32.xlu0 %v866, 4
      %v891 = vpop.permute.xlu0 %890
      %892 = vrot.lane.b32.xlu0 %v867, 4
      %v893 = vpop.permute.xlu0 %892
      %894 = vrot.lane.b32.xlu0 %v868, 4
      %v895 = vpop.permute.xlu0 %894
      %896 = vrot.lane.b32.xlu0 %v869, 4
      %v897 = vpop.permute.xlu0 %896
      %898 = vrot.lane.b32.xlu0 %v870, 4
      %v899 = vpop.permute.xlu0 %898
      %900 = vrot.lane.b32.xlu0 %v871, 4
      %v901 = vpop.permute.xlu0 %900
      %902 = vrot.lane.b32.xlu0 %v872, 4
      %v903 = vpop.permute.xlu0 %902
      %904 = vrot.lane.b32.xlu0 %v873, 4
      %v905 = vpop.permute.xlu0 %904
      %906 = vrot.lane.b32.xlu0 %v874, 4
      %v907 = vpop.permute.xlu0 %906
      %908 = vrot.lane.b32.xlu0 %v875, 4
      %v909 = vpop.permute.xlu0 %908
      %910 = vrot.lane.b32.xlu0 %v876, 4
      %v911 = vpop.permute.xlu0 %910
      %912 = vrot.lane.b32.xlu0 %v877, 4
      %v913 = vpop.permute.xlu0 %912
      %vm932 = vcmask 64544
      %933 = vst.msk [vmem:[#allocation2] sm:$0xff] %vm932, %v879
      %934 = vst.msk [vmem:[#allocation2 + $0x8] sm:$0xff] %vm932, %v881
      %935 = vst.msk [vmem:[#allocation2 + $0x10] sm:$0xff] %vm932, %v883
      %936 = vst.msk [vmem:[#allocation2 + $0x18] sm:$0xff] %vm932, %v885
      %937 = vst.msk [vmem:[#allocation2 + $0x20] sm:$0xff] %vm932, %v887
      %938 = vst.msk [vmem:[#allocation2 + $0x28] sm:$0xff] %vm932, %v889
      %939 = vst.msk [vmem:[#allocation2 + $0x30] sm:$0xff] %vm932, %v891
      %940 = vst.msk [vmem:[#allocation2 + $0x38] sm:$0xff] %vm932, %v893
      %941 = vst.msk [vmem:[#allocation2 + $0x40] sm:$0xff] %vm932, %v895
      %942 = vst.msk [vmem:[#allocation2 + $0x48] sm:$0xff] %vm932, %v897
      %943 = vst.msk [vmem:[#allocation2 + $0x50] sm:$0xff] %vm932, %v899
      %944 = vst.msk [vmem:[#allocation2 + $0x58] sm:$0xff] %vm932, %v901
      %945 = vst.msk [vmem:[#allocation2 + $0x60] sm:$0xff] %vm932, %v903
      %946 = vst.msk [vmem:[#allocation2 + $0x68] sm:$0xff] %vm932, %v905
      %947 = vst.msk [vmem:[#allocation2 + $0x70] sm:$0xff] %vm932, %v907
      %948 = vst.msk [vmem:[#allocation2 + $0x78] sm:$0xff] %vm932, %v909
      %949 = vst.msk [vmem:[#allocation2 + $0x80] sm:$0xff] %vm932, %v911
      %950 = vst.msk [vmem:[#allocation2 + $0x88] sm:$0xff] %vm932, %v913
      %vm969 = vcmask 1042432
      %vm970 = vcmask 1046532
      %vm971 = vmor %vm969, %vm970
      %v972 = vrot.slane %v208, 5
      %v973 = vrot.slane %v972, 4
      %v974 = vrot.slane %v209, 5
      %v975 = vsel %vm971, %v973, %v974
      %v976 = vrot.slane %v974, 4
      %v977 = vrot.slane %v210, 5
      %v978 = vsel %vm971, %v976, %v977
      %v979 = vrot.slane %v211, 5
      %v980 = vrot.slane %v979, 4
      %v981 = vrot.slane %v212, 5
      %v982 = vsel %vm971, %v980, %v981
      %v983 = vrot.slane %v981, 4
      %v984 = vrot.slane %v213, 5
      %v985 = vsel %vm971, %v983, %v984
      %v986 = vrot.slane %v214, 5
      %v987 = vrot.slane %v986, 4
      %v988 = vrot.slane %v215, 5
      %v989 = vsel %vm971, %v987, %v988
      %v990 = vrot.slane %v988, 4
      %v991 = vrot.slane %v216, 5
      %v992 = vsel %vm971, %v990, %v991
      %v993 = vrot.slane %v217, 5
      %v994 = vrot.slane %v993, 4
      %v995 = vrot.slane %v218, 5
      %v996 = vsel %vm971, %v994, %v995
      %v997 = vrot.slane %v995, 4
      %v998 = vrot.slane %v219, 5
      %v999 = vsel %vm971, %v997, %v998
      %v1000 = vrot.slane %v220, 5
      %v1001 = vrot.slane %v1000, 4
      %v1002 = vrot.slane %v221, 5
      %v1003 = vsel %vm971, %v1001, %v1002
      %v1004 = vrot.slane %v1002, 4
      %v1005 = vrot.slane %v222, 5
      %v1006 = vsel %vm971, %v1004, %v1005
      %v1007 = vrot.slane %v223, 5
      %v1008 = vrot.slane %v1007, 4
      %v1009 = vrot.slane %v224, 5
      %v1010 = vsel %vm971, %v1008, %v1009
      %v1011 = vrot.slane %v1009, 4
      %v1012 = vrot.slane %v225, 5
      %v1013 = vsel %vm971, %v1011, %v1012
      %v1014 = vrot.slane %v226, 5
      %v1015 = vrot.slane %v1014, 4
      %v1016 = vrot.slane %v227, 5
      %v1017 = vsel %vm971, %v1015, %v1016
      %v1018 = vrot.slane %v1016, 4
      %v1019 = vrot.slane %v228, 5
      %v1020 = vsel %vm971, %v1018, %v1019
      %v1021 = vrot.slane %v229, 5
      %v1022 = vrot.slane %v1021, 4
      %v1023 = vrot.slane %v230, 5
      %v1024 = vsel %vm971, %v1022, %v1023
      %v1025 = vrot.slane %v1023, 4
      %v1026 = vrot.slane %v231, 5
      %v1027 = vsel %vm971, %v1025, %v1026
      %v1028 = vrot.slane %v232, 5
      %v1029 = vrot.slane %v1028, 4
      %v1030 = vrot.slane %v233, 5
      %v1031 = vsel %vm971, %v1029, %v1030
      %v1032 = vrot.slane %v1030, 4
      %v1033 = vrot.slane %v234, 5
      %v1034 = vsel %vm971, %v1032, %v1033
      %v1035 = vrot.slane %v235, 5
      %v1036 = vrot.slane %v1035, 4
      %v1037 = vrot.slane %v236, 5
      %v1038 = vsel %vm971, %v1036, %v1037
      %v1039 = vrot.slane %v1037, 4
      %v1040 = vrot.slane %v237, 5
      %v1041 = vsel %vm971, %v1039, %v1040
      %v1042 = vrot.slane %v238, 5
      %v1043 = vrot.slane %v1042, 4
      %v1044 = vrot.slane %v239, 5
      %v1045 = vsel %vm971, %v1043, %v1044
      %v1046 = vrot.slane %v1044, 4
      %v1047 = vrot.slane %v240, 5
      %v1048 = vsel %vm971, %v1046, %v1047
      %v1049 = vrot.slane %v241, 5
      %v1050 = vrot.slane %v1049, 4
      %v1051 = vrot.slane %v242, 5
      %v1052 = vsel %vm971, %v1050, %v1051
      %v1053 = vrot.slane %v1051, 4
      %v1054 = vrot.slane %v243, 5
      %v1055 = vsel %vm971, %v1053, %v1054
      %v1056 = vrot.slane %v244, 5
      %v1057 = vrot.slane %v1056, 4
      %v1058 = vrot.slane %v245, 5
      %v1059 = vsel %vm971, %v1057, %v1058
      %v1060 = vrot.slane %v1058, 4
      %v1061 = vrot.slane %v246, 5
      %v1062 = vsel %vm971, %v1060, %v1061
      %v1063 = vrot.slane %v247, 5
      %v1064 = vrot.slane %v1063, 4
      %v1065 = vrot.slane %v248, 5
      %v1066 = vsel %vm971, %v1064, %v1065
      %v1067 = vrot.slane %v1065, 4
      %v1068 = vrot.slane %v249, 5
      %v1069 = vsel %vm971, %v1067, %v1068
      %v1070 = vrot.slane %v250, 5
      %v1071 = vrot.slane %v1070, 4
      %v1072 = vrot.slane %v251, 5
      %v1073 = vsel %vm971, %v1071, %v1072
      %v1074 = vrot.slane %v1072, 4
      %v1075 = vrot.slane %v252, 5
      %v1076 = vsel %vm971, %v1074, %v1075
      %v1077 = vrot.slane %v253, 5
      %v1078 = vrot.slane %v1077, 4
      %v1079 = vrot.slane %v254, 5
      %v1080 = vsel %vm971, %v1078, %v1079
      %v1081 = vrot.slane %v1079, 4
      %v1082 = vrot.slane %v255, 5
      %v1083 = vsel %vm971, %v1081, %v1082
      %v1084 = vrot.slane %v256, 5
      %v1085 = vrot.slane %v1084, 4
      %v1086 = vrot.slane %v257, 5
      %v1087 = vsel %vm971, %v1085, %v1086
      %v1088 = vrot.slane %v1086, 4
      %v1089 = vrot.slane %v258, 5
      %v1090 = vsel %vm971, %v1088, %v1089
      %v1091 = vrot.slane %v259, 5
      %v1092 = vrot.slane %v1091, 4
      %v1093 = vrot.slane %v260, 5
      %v1094 = vsel %vm971, %v1092, %v1093
      %v1095 = vrot.slane %v1093, 4
      %v1096 = vrot.slane %v261, 5
      %v1097 = vsel %vm971, %v1095, %v1096
      %v1098 = vunpack.c.l.b16 %v975
      %v1099 = vunpack.c.l.b16 %v978
      %v1100 = vunpack.c.l.b16 %v982
      %v1101 = vunpack.c.l.b16 %v985
      %v1102 = vunpack.c.l.b16 %v989
      %v1103 = vunpack.c.l.b16 %v992
      %v1104 = vunpack.c.l.b16 %v996
      %v1105 = vunpack.c.l.b16 %v999
      %v1106 = vunpack.c.l.b16 %v1003
      %v1107 = vunpack.c.l.b16 %v1006
      %v1108 = vunpack.c.l.b16 %v1010
      %v1109 = vunpack.c.l.b16 %v1013
      %v1110 = vunpack.c.l.b16 %v1017
      %v1111 = vunpack.c.l.b16 %v1020
      %v1112 = vunpack.c.l.b16 %v1024
      %v1113 = vunpack.c.l.b16 %v1027
      %v1114 = vunpack.c.l.b16 %v1031
      %v1115 = vunpack.c.l.b16 %v1034
      %v1116 = vunpack.c.l.b16 %v1038
      %v1117 = vunpack.c.l.b16 %v1041
      %v1118 = vunpack.c.l.b16 %v1045
      %v1119 = vunpack.c.l.b16 %v1048
      %v1120 = vunpack.c.l.b16 %v1052
      %v1121 = vunpack.c.l.b16 %v1055
      %v1122 = vunpack.c.l.b16 %v1059
      %v1123 = vunpack.c.l.b16 %v1062
      %v1124 = vunpack.c.l.b16 %v1066
      %v1125 = vunpack.c.l.b16 %v1069
      %v1126 = vunpack.c.l.b16 %v1073
      %v1127 = vunpack.c.l.b16 %v1076
      %v1128 = vunpack.c.l.b16 %v1080
      %v1129 = vunpack.c.l.b16 %v1083
      %v1130 = vunpack.c.l.b16 %v1087
      %v1131 = vunpack.c.l.b16 %v1090
      %v1132 = vunpack.c.l.b16 %v1094
      %v1133 = vunpack.c.l.b16 %v1097
      %v1134 = vpack.c.b16 %v1099, %v1098
      %v1135 = vpack.c.b16 %v1101, %v1100
      %v1136 = vpack.c.b16 %v1103, %v1102
      %v1137 = vpack.c.b16 %v1105, %v1104
      %v1138 = vpack.c.b16 %v1107, %v1106
      %v1139 = vpack.c.b16 %v1109, %v1108
      %v1140 = vpack.c.b16 %v1111, %v1110
      %v1141 = vpack.c.b16 %v1113, %v1112
      %v1142 = vpack.c.b16 %v1115, %v1114
      %v1143 = vpack.c.b16 %v1117, %v1116
      %v1144 = vpack.c.b16 %v1119, %v1118
      %v1145 = vpack.c.b16 %v1121, %v1120
      %v1146 = vpack.c.b16 %v1123, %v1122
      %v1147 = vpack.c.b16 %v1125, %v1124
      %v1148 = vpack.c.b16 %v1127, %v1126
      %v1149 = vpack.c.b16 %v1129, %v1128
      %v1150 = vpack.c.b16 %v1131, %v1130
      %v1151 = vpack.c.b16 %v1133, %v1132
      %1152 = vrot.lane.b32.xlu0 %v1134, 8
      %v1153 = vpop.permute.xlu0 %1152
      %1154 = vrot.lane.b32.xlu0 %v1135, 8
      %v1155 = vpop.permute.xlu0 %1154
      %1156 = vrot.lane.b32.xlu0 %v1136, 8
      %v1157 = vpop.permute.xlu0 %1156
      %1158 = vrot.lane.b32.xlu0 %v1137, 8
      %v1159 = vpop.permute.xlu0 %1158
      %1160 = vrot.lane.b32.xlu0 %v1138, 8
      %v1161 = vpop.permute.xlu0 %1160
      %1162 = vrot.lane.b32.xlu0 %v1139, 8
      %v1163 = vpop.permute.xlu0 %1162
      %1164 = vrot.lane.b32.xlu0 %v1140, 8
      %v1165 = vpop.permute.xlu0 %1164
      %1166 = vrot.lane.b32.xlu0 %v1141, 8
      %v1167 = vpop.permute.xlu0 %1166
      %1168 = vrot.lane.b32.xlu0 %v1142, 8
      %v1169 = vpop.permute.xlu0 %1168
      %1170 = vrot.lane.b32.xlu0 %v1143, 8
      %v1171 = vpop.permute.xlu0 %1170
      %1172 = vrot.lane.b32.xlu0 %v1144, 8
      %v1173 = vpop.permute.xlu0 %1172
      %1174 = vrot.lane.b32.xlu0 %v1145, 8
      %v1175 = vpop.permute.xlu0 %1174
      %1176 = vrot.lane.b32.xlu0 %v1146, 8
      %v1177 = vpop.permute.xlu0 %1176
      %1178 = vrot.lane.b32.xlu0 %v1147, 8
      %v1179 = vpop.permute.xlu0 %1178
      %1180 = vrot.lane.b32.xlu0 %v1148, 8
      %v1181 = vpop.permute.xlu0 %1180
      %1182 = vrot.lane.b32.xlu0 %v1149, 8
      %v1183 = vpop.permute.xlu0 %1182
      %1184 = vrot.lane.b32.xlu0 %v1150, 8
      %v1185 = vpop.permute.xlu0 %1184
      %1186 = vrot.lane.b32.xlu0 %v1151, 8
      %v1187 = vpop.permute.xlu0 %1186
      %vm1206 = vcmask 97344
      %1207 = vst.msk [vmem:[#allocation2] sm:$0xff] %vm1206, %v1153
      %1208 = vst.msk [vmem:[#allocation2 + $0x8] sm:$0xff] %vm1206, %v1155
      %1209 = vst.msk [vmem:[#allocation2 + $0x10] sm:$0xff] %vm1206, %v1157
      %1210 = vst.msk [vmem:[#allocation2 + $0x18] sm:$0xff] %vm1206, %v1159
      %1211 = vst.msk [vmem:[#allocation2 + $0x20] sm:$0xff] %vm1206, %v1161
      %1212 = vst.msk [vmem:[#allocation2 + $0x28] sm:$0xff] %vm1206, %v1163
      %1213 = vst.msk [vmem:[#allocation2 + $0x30] sm:$0xff] %vm1206, %v1165
      %1214 = vst.msk [vmem:[#allocation2 + $0x38] sm:$0xff] %vm1206, %v1167
      %1215 = vst.msk [vmem:[#allocation2 + $0x40] sm:$0xff] %vm1206, %v1169
      %1216 = vst.msk [vmem:[#allocation2 + $0x48] sm:$0xff] %vm1206, %v1171
      %1217 = vst.msk [vmem:[#allocation2 + $0x50] sm:$0xff] %vm1206, %v1173
      %1218 = vst.msk [vmem:[#allocation2 + $0x58] sm:$0xff] %vm1206, %v1175
      %1219 = vst.msk [vmem:[#allocation2 + $0x60] sm:$0xff] %vm1206, %v1177
      %1220 = vst.msk [vmem:[#allocation2 + $0x68] sm:$0xff] %vm1206, %v1179
      %1221 = vst.msk [vmem:[#allocation2 + $0x70] sm:$0xff] %vm1206, %v1181
      %1222 = vst.msk [vmem:[#allocation2 + $0x78] sm:$0xff] %vm1206, %v1183
      %1223 = vst.msk [vmem:[#allocation2 + $0x80] sm:$0xff] %vm1206, %v1185
      %1224 = vst.msk [vmem:[#allocation2 + $0x88] sm:$0xff] %vm1206, %v1187
      %v1225 = vld [vmem:[#allocation2] sm:$0xff]
      %v1226 = vld [vmem:[#allocation2 + $0x8] sm:$0xff]
      %v1227 = vld [vmem:[#allocation2 + $0x10] sm:$0xff]
      %v1228 = vld [vmem:[#allocation2 + $0x18] sm:$0xff]
      %v1229 = vld [vmem:[#allocation2 + $0x20] sm:$0xff]
      %v1230 = vld [vmem:[#allocation2 + $0x28] sm:$0xff]
      %v1231 = vld [vmem:[#allocation2 + $0x30] sm:$0xff]
      %v1232 = vld [vmem:[#allocation2 + $0x38] sm:$0xff]
      %v1233 = vld [vmem:[#allocation2 + $0x40] sm:$0xff]
      %v1234 = vld [vmem:[#allocation2 + $0x48] sm:$0xff]
      %v1235 = vld [vmem:[#allocation2 + $0x50] sm:$0xff]
      %v1236 = vld [vmem:[#allocation2 + $0x58] sm:$0xff]
      %v1237 = vld [vmem:[#allocation2 + $0x60] sm:$0xff]
      %v1238 = vld [vmem:[#allocation2 + $0x68] sm:$0xff]
      %v1239 = vld [vmem:[#allocation2 + $0x70] sm:$0xff]
      %v1240 = vld [vmem:[#allocation2 + $0x78] sm:$0xff]
      %v1241 = vld [vmem:[%s1] sm:$0xf]
      %v1242 = vld [vmem:[%s1 + $0x4] sm:$0x3]
      %v1243 = vld [vmem:[#allocation2 + $0x80] sm:$0xff]
      %s1244 = scalar_lea.vmem %s1, 8
      %v1245 = vld [vmem:[%s1244] sm:$0xf]
      %v1246 = vld [vmem:[%s1244 + $0x4] sm:$0x3]
      %v1249 = vunpack.c.l.b16 %v1245
      %v1250 = vunpack.c.l.b16 %v1246
      %v1251 = vpack.c.b16 %v1250, %v1249
      %vm1252 = vcmask 97280
      %v1254 = vsel %vm1252, %v1226, 0
      %v1257 = vsel %vm1252, %v1227, 0
      %v1260 = vsel %vm1252, %v1228, 0
      %v1263 = vsel %vm1252, %v1229, 0
      %v1266 = vsel %vm1252, %v1230, 0
      %v1269 = vsel %vm1252, %v1231, 0
      %v1272 = vsel %vm1252, %v1232, 0
      %v1275 = vsel %vm1252, %v1233, 0
      %v1278 = vsel %vm1252, %v1234, 0
      %v1281 = vsel %vm1252, %v1235, 0
      %v1284 = vsel %vm1252, %v1236, 0
      %v1287 = vsel %vm1252, %v1237, 0
      %v1290 = vsel %vm1252, %v1238, 0
      %v1293 = vsel %vm1252, %v1239, 0
      %v1296 = vsel %vm1252, %v1240, 0
      %v1299 = vsel %vm1252, %v1243, 0
      %vm1301 = vcmask 1045504
      %v1303 = vsel %vm1301, %v1251, 0
      %1305 = vmatprep.subr.bf16.mxu0 0
      %1306 = vmatpush1.bf16.msra.mxu0 %v1303
      %1307 = vmatprep.subr.bf16.mxu0 0
      %1308 = vmatpush1.bf16.msra.mxu0 0
      %1309 = vmatprep.subr.bf16.mxu0 0
      %1310 = vmatpush1.bf16.msra.mxu0 0
      %1311 = vmatprep.subr.bf16.mxu0 0
      %1312 = vmatpush1.bf16.msra.mxu0 0
      %1313 = vmatprep.subr.bf16.mxu0 0
      %1314 = vmatpush1.bf16.msra.mxu0 0
      %1315 = vmatprep.subr.bf16.mxu0 0
      %1316 = vmatpush1.bf16.msra.mxu0 0
      %1317 = vmatprep.subr.bf16.mxu0 0
      %1318 = vmatpush1.bf16.msra.mxu0 0
      %1319 = vmatprep.subr.bf16.mxu0 0
      %1320 = vmatpush1.bf16.msra.mxu0 0
      %1321 = vmatprep.subr.bf16.mxu0 0
      %1322 = vmatpush1.bf16.msra.mxu0 0
      %1323 = vmatprep.subr.bf16.mxu0 0
      %1324 = vmatpush1.bf16.msra.mxu0 0
      %1325 = vmatprep.subr.bf16.mxu0 0
      %1326 = vmatpush1.bf16.msra.mxu0 0
      %1327 = vmatprep.subr.bf16.mxu0 0
      %1328 = vmatpush1.bf16.msra.mxu0 0
      %1329 = vmatprep.subr.bf16.mxu0 0
      %1330 = vmatpush1.bf16.msra.mxu0 0
      %1331 = vmatprep.subr.bf16.mxu0 0
      %1332 = vmatpush1.bf16.msra.mxu0 0
      %1333 = vmatprep.subr.bf16.mxu0 0
      %1334 = vmatpush1.bf16.msra.mxu0 0
      %1335 = vmatprep.subr.bf16.mxu0 0
      %1336 = vmatpush1.bf16.msra.mxu0 0
      %1337 = vmatprep.mubr.bf16.mxu0 0
      %1338 = vmatmul.mubr.bf16.gmra.mrb[0].mxu0 %v1254
      %v1339 = vpop.f32.mrb[0].mxu0
      %v1340 = vadd.f32 0.0, %v1339
      %v1341 = vpop.f32.mrb[0].mxu0
      %v1342 = vpop.f32.mrb[0].mxu0
      %v1343 = vadd.f32 0.0, %v1342
      %v1344 = vpop.f32.mrb[0].mxu0
      %1345 = vmatprep.mubr.bf16.mxu0 0
      %1346 = vmatmul.mubr.bf16.gmra.mrb[0].mxu0 %v1257
      %v1347 = vpop.f32.mrb[0].mxu0
      %v1348 = vadd.f32 0.0, %v1347
      %v1349 = vpop.f32.mrb[0].mxu0
      %v1350 = vpop.f32.mrb[0].mxu0
      %v1351 = vadd.f32 0.0, %v1350
      %v1352 = vpop.f32.mrb[0].mxu0
      %1353 = vmatprep.mubr.bf16.mxu0 0
      %1354 = vmatmul.mubr.bf16.gmra.mrb[0].mxu0 %v1260
      %v1355 = vpop.f32.mrb[0].mxu0
      %v1356 = vadd.f32 0.0, %v1355
      %v1357 = vpop.f32.mrb[0].mxu0
      %v1358 = vpop.f32.mrb[0].mxu0
      %v1359 = vadd.f32 0.0, %v1358
      %v1360 = vpop.f32.mrb[0].mxu0
      %1361 = vmatprep.mubr.bf16.mxu0 0
      %1362 = vmatmul.mubr.bf16.gmra.mrb[0].mxu0 %v1263
      %v1363 = vpop.f32.mrb[0].mxu0
      %v1364 = vadd.f32 0.0, %v1363
      %v1365 = vpop.f32.mrb[0].mxu0
      %v1366 = vpop.f32.mrb[0].mxu0
      %v1367 = vadd.f32 0.0, %v1366
      %v1368 = vpop.f32.mrb[0].mxu0
      %1369 = vmatprep.mubr.bf16.mxu0 0
      %1370 = vmatmul.mubr.bf16.gmra.mrb[0].mxu0 %v1266
      %v1371 = vpop.f32.mrb[0].mxu0
      %v1372 = vadd.f32 0.0, %v1371
      %v1373 = vpop.f32.mrb[0].mxu0
      %v1374 = vpop.f32.mrb[0].mxu0
      %v1375 = vadd.f32 0.0, %v1374
      %v1376 = vpop.f32.mrb[0].mxu0
      %1377 = vmatprep.mubr.bf16.mxu0 0
      %1378 = vmatmul.mubr.bf16.gmra.mrb[0].mxu0 %v1269
      %v1379 = vpop.f32.mrb[0].mxu0
      %v1380 = vadd.f32 0.0, %v1379
      %v1381 = vpop.f32.mrb[0].mxu0
      %v1382 = vpop.f32.mrb[0].mxu0
      %v1383 = vadd.f32 0.0, %v1382
      %v1384 = vpop.f32.mrb[0].mxu0
      %1385 = vmatprep.mubr.bf16.mxu0 0
      %1386 = vmatmul.mubr.bf16.gmra.mrb[0].mxu0 %v1272
      %v1387 = vpop.f32.mrb[0].mxu0
      %v1388 = vadd.f32 0.0, %v1387
      %v1389 = vpop.f32.mrb[0].mxu0
      %v1390 = vpop.f32.mrb[0].mxu0
      %v1391 = vadd.f32 0.0, %v1390
      %v1392 = vpop.f32.mrb[0].mxu0
      %1393 = vmatprep.mubr.bf16.mxu0 0
      %1394 = vmatmul.mubr.bf16.gmra.mrb[0].mxu0 %v1275
      %v1395 = vpop.f32.mrb[0].mxu0
      %v1396 = vadd.f32 0.0, %v1395
      %v1397 = vpop.f32.mrb[0].mxu0
      %v1398 = vpop.f32.mrb[0].mxu0
      %v1399 = vadd.f32 0.0, %v1398
      %v1400 = vpop.f32.mrb[0].mxu0
      %1401 = vmatprep.mubr.bf16.mxu0 0
      %1402 = vmatmul.mubr.bf16.gmra.mrb[0].mxu0 %v1278
      %v1403 = vpop.f32.mrb[0].mxu0
      %v1404 = vadd.f32 0.0, %v1403
      %v1405 = vpop.f32.mrb[0].mxu0
      %v1406 = vpop.f32.mrb[0].mxu0
      %v1407 = vadd.f32 0.0, %v1406
      %v1408 = vpop.f32.mrb[0].mxu0
      %1409 = vmatprep.mubr.bf16.mxu0 0
      %1410 = vmatmul.mubr.bf16.gmra.mrb[0].mxu0 %v1281
      %v1411 = vpop.f32.mrb[0].mxu0
      %v1412 = vadd.f32 0.0, %v1411
      %v1413 = vpop.f32.mrb[0].mxu0
      %v1414 = vpop.f32.mrb[0].mxu0
      %v1415 = vadd.f32 0.0, %v1414
      %v1416 = vpop.f32.mrb[0].mxu0
      %1417 = vmatprep.mubr.bf16.mxu0 0
      %1418 = vmatmul.mubr.bf16.gmra.mrb[0].mxu0 %v1284
      %v1419 = vpop.f32.mrb[0].mxu0
      %v1420 = vadd.f32 0.0, %v1419
      %v1421 = vpop.f32.mrb[0].mxu0
      %v1422 = vpop.f32.mrb[0].mxu0
      %v1423 = vadd.f32 0.0, %v1422
      %v1424 = vpop.f32.mrb[0].mxu0
      %1425 = vmatprep.mubr.bf16.mxu0 0
      %1426 = vmatmul.mubr.bf16.gmra.mrb[0].mxu0 %v1287
      %v1427 = vpop.f32.mrb[0].mxu0
      %v1428 = vadd.f32 0.0, %v1427
      %v1429 = vpop.f32.mrb[0].mxu0
      %v1430 = vpop.f32.mrb[0].mxu0
      %v1431 = vadd.f32 0.0, %v1430
      %v1432 = vpop.f32.mrb[0].mxu0
      %1433 = vmatprep.mubr.bf16.mxu0 0
      %1434 = vmatmul.mubr.bf16.gmra.mrb[0].mxu0 %v1290
      %v1435 = vpop.f32.mrb[0].mxu0
      %v1436 = vadd.f32 0.0, %v1435
      %v1437 = vpop.f32.mrb[0].mxu0
      %v1438 = vpop.f32.mrb[0].mxu0
      %v1439 = vadd.f32 0.0, %v1438
      %v1440 = vpop.f32.mrb[0].mxu0
      %1441 = vmatprep.mubr.bf16.mxu0 0
      %1442 = vmatmul.mubr.bf16.gmra.mrb[0].mxu0 %v1293
      %v1443 = vpop.f32.mrb[0].mxu0
      %v1444 = vadd.f32 0.0, %v1443
      %v1445 = vpop.f32.mrb[0].mxu0
      %v1446 = vpop.f32.mrb[0].mxu0
      %v1447 = vadd.f32 0.0, %v1446
      %v1448 = vpop.f32.mrb[0].mxu0
      %1449 = vmatprep.mubr.bf16.mxu0 0
      %1450 = vmatmul.mubr.bf16.gmra.mrb[0].mxu0 %v1296
      %v1451 = vpop.f32.mrb[0].mxu0
      %v1452 = vadd.f32 0.0, %v1451
      %v1453 = vpop.f32.mrb[0].mxu0
      %v1454 = vpop.f32.mrb[0].mxu0
      %v1455 = vadd.f32 0.0, %v1454
      %v1456 = vpop.f32.mrb[0].mxu0
      %1457 = vmatprep.mubr.bf16.mxu0 0
      %1458 = vmatmul.mubr.bf16.gmra.mrb[0].mxu0 %v1299
      %v1459 = vpop.f32.mrb[0].mxu0
      %v1460 = vadd.f32 0.0, %v1459
      %v1461 = vpop.f32.mrb[0].mxu0
      %v1462 = vpop.f32.mrb[0].mxu0
      %v1463 = vadd.f32 0.0, %v1462
      %v1464 = vpop.f32.mrb[0].mxu0
      %1465 = vdwg.mxu0
      %v1468 = vunpack.c.l.b16 %v1241
      %v1469 = vunpack.c.l.b16 %v1242
      %v1470 = vpack.c.b16 %v1469, %v1468
      %v1472 = vsel %vm1252, %v1225, 0
      %v1475 = vsel %vm1301, %v1470, 0
      %1477 = vmatprep.subr.bf16.mxu0 0
      %1478 = vmatpush1.bf16.msra.mxu0 %v1475
      %1479 = vmatprep.subr.bf16.mxu0 0
      %1480 = vmatpush1.bf16.msra.mxu0 0
      %1481 = vmatprep.subr.bf16.mxu0 0
      %1482 = vmatpush1.bf16.msra.mxu0 0
      %1483 = vmatprep.subr.bf16.mxu0 0
      %1484 = vmatpush1.bf16.msra.mxu0 0
      %1485 = vmatprep.subr.bf16.mxu0 0
      %1486 = vmatpush1.bf16.msra.mxu0 0
      %1487 = vmatprep.subr.bf16.mxu0 0
      %1488 = vmatpush1.bf16.msra.mxu0 0
      %1489 = vmatprep.subr.bf16.mxu0 0
      %1490 = vmatpush1.bf16.msra.mxu0 0
      %1491 = vmatprep.subr.bf16.mxu0 0
      %1492 = vmatpush1.bf16.msra.mxu0 0
      %1493 = vmatprep.subr.bf16.mxu0 0
      %1494 = vmatpush1.bf16.msra.mxu0 0
      %1495 = vmatprep.subr.bf16.mxu0 0
      %1496 = vmatpush1.bf16.msra.mxu0 0
      %1497 = vmatprep.subr.bf16.mxu0 0
      %1498 = vmatpush1.bf16.msra.mxu0 0
      %1499 = vmatprep.subr.bf16.mxu0 0
      %1500 = vmatpush1.bf16.msra.mxu0 0
      %1501 = vmatprep.subr.bf16.mxu0 0
      %1502 = vmatpush1.bf16.msra.mxu0 0
      %1503 = vmatprep.subr.bf16.mxu0 0
      %1504 = vmatpush1.bf16.msra.mxu0 0
      %1505 = vmatprep.subr.bf16.mxu0 0
      %1506 = vmatpush1.bf16.msra.mxu0 0
      %1507 = vmatprep.subr.bf16.mxu0 0
      %1508 = vmatpush1.bf16.msra.mxu0 0
      %1509 = vmatprep.mubr.bf16.mxu0 0
      %1510 = vmatmul.mubr.bf16.gmra.mrb[0].mxu0 %v1472
      %v1511 = vpop.f32.mrb[0].mxu0
      %v1512 = vadd.f32 %v1340, %v1511
      %v1513 = vpop.f32.mrb[0].mxu0
      %v1514 = vpop.f32.mrb[0].mxu0
      %v1515 = vadd.f32 %v1343, %v1514
      %v1516 = vpop.f32.mrb[0].mxu0
      %1517 = vmatprep.mubr.bf16.mxu0 0
      %1518 = vmatmul.mubr.bf16.gmra.mrb[0].mxu0 %v1254
      %v1519 = vpop.f32.mrb[0].mxu0
      %v1520 = vadd.f32 %v1348, %v1519
      %v1521 = vpop.f32.mrb[0].mxu0
      %v1522 = vpop.f32.mrb[0].mxu0
      %v1523 = vadd.f32 %v1351, %v1522
      %v1524 = vpop.f32.mrb[0].mxu0
      %1525 = vmatprep.mubr.bf16.mxu0 0
      %1526 = vmatmul.mubr.bf16.gmra.mrb[0].mxu0 %v1257
      %v1527 = vpop.f32.mrb[0].mxu0
      %v1528 = vadd.f32 %v1356, %v1527
      %v1529 = vpop.f32.mrb[0].mxu0
      %v1530 = vpop.f32.mrb[0].mxu0
      %v1531 = vadd.f32 %v1359, %v1530
      %v1532 = vpop.f32.mrb[0].mxu0
      %1533 = vmatprep.mubr.bf16.mxu0 0
      %1534 = vmatmul.mubr.bf16.gmra.mrb[0].mxu0 %v1260
      %v1535 = vpop.f32.mrb[0].mxu0
      %v1536 = vadd.f32 %v1364, %v1535
      %v1537 = vpop.f32.mrb[0].mxu0
      %v1538 = vpop.f32.mrb[0].mxu0
      %v1539 = vadd.f32 %v1367, %v1538
      %v1540 = vpop.f32.mrb[0].mxu0
      %1541 = vmatprep.mubr.bf16.mxu0 0
      %1542 = vmatmul.mubr.bf16.gmra.mrb[0].mxu0 %v1263
      %v1543 = vpop.f32.mrb[0].mxu0
      %v1544 = vadd.f32 %v1372, %v1543
      %v1545 = vpop.f32.mrb[0].mxu0
      %v1546 = vpop.f32.mrb[0].mxu0
      %v1547 = vadd.f32 %v1375, %v1546
      %v1548 = vpop.f32.mrb[0].mxu0
      %1549 = vmatprep.mubr.bf16.mxu0 0
      %1550 = vmatmul.mubr.bf16.gmra.mrb[0].mxu0 %v1266
      %v1551 = vpop.f32.mrb[0].mxu0
      %v1552 = vadd.f32 %v1380, %v1551
      %v1553 = vpop.f32.mrb[0].mxu0
      %v1554 = vpop.f32.mrb[0].mxu0
      %v1555 = vadd.f32 %v1383, %v1554
      %v1556 = vpop.f32.mrb[0].mxu0
      %1557 = vmatprep.mubr.bf16.mxu0 0
      %1558 = vmatmul.mubr.bf16.gmra.mrb[0].mxu0 %v1269
      %v1559 = vpop.f32.mrb[0].mxu0
      %v1560 = vadd.f32 %v1388, %v1559
      %v1561 = vpop.f32.mrb[0].mxu0
      %v1562 = vpop.f32.mrb[0].mxu0
      %v1563 = vadd.f32 %v1391, %v1562
      %v1564 = vpop.f32.mrb[0].mxu0
      %1565 = vmatprep.mubr.bf16.mxu0 0
      %1566 = vmatmul.mubr.bf16.gmra.mrb[0].mxu0 %v1272
      %v1567 = vpop.f32.mrb[0].mxu0
      %v1568 = vadd.f32 %v1396, %v1567
      %v1569 = vpop.f32.mrb[0].mxu0
      %v1570 = vpop.f32.mrb[0].mxu0
      %v1571 = vadd.f32 %v1399, %v1570
      %v1572 = vpop.f32.mrb[0].mxu0
      %1573 = vmatprep.mubr.bf16.mxu0 0
      %1574 = vmatmul.mubr.bf16.gmra.mrb[0].mxu0 %v1275
      %v1575 = vpop.f32.mrb[0].mxu0
      %v1576 = vadd.f32 %v1404, %v1575
      %v1577 = vpop.f32.mrb[0].mxu0
      %v1578 = vpop.f32.mrb[0].mxu0
      %v1579 = vadd.f32 %v1407, %v1578
      %v1580 = vpop.f32.mrb[0].mxu0
      %1581 = vmatprep.mubr.bf16.mxu0 0
      %1582 = vmatmul.mubr.bf16.gmra.mrb[0].mxu0 %v1278
      %v1583 = vpop.f32.mrb[0].mxu0
      %v1584 = vadd.f32 %v1412, %v1583
      %v1585 = vpop.f32.mrb[0].mxu0
      %v1586 = vpop.f32.mrb[0].mxu0
      %v1587 = vadd.f32 %v1415, %v1586
      %v1588 = vpop.f32.mrb[0].mxu0
      %1589 = vmatprep.mubr.bf16.mxu0 0
      %1590 = vmatmul.mubr.bf16.gmra.mrb[0].mxu0 %v1281
      %v1591 = vpop.f32.mrb[0].mxu0
      %v1592 = vadd.f32 %v1420, %v1591
      %v1593 = vpop.f32.mrb[0].mxu0
      %v1594 = vpop.f32.mrb[0].mxu0
      %v1595 = vadd.f32 %v1423, %v1594
      %v1596 = vpop.f32.mrb[0].mxu0
      %1597 = vmatprep.mubr.bf16.mxu0 0
      %1598 = vmatmul.mubr.bf16.gmra.mrb[0].mxu0 %v1284
      %v1599 = vpop.f32.mrb[0].mxu0
      %v1600 = vadd.f32 %v1428, %v1599
      %v1601 = vpop.f32.mrb[0].mxu0
      %v1602 = vpop.f32.mrb[0].mxu0
      %v1603 = vadd.f32 %v1431, %v1602
      %v1604 = vpop.f32.mrb[0].mxu0
      %1605 = vmatprep.mubr.bf16.mxu0 0
      %1606 = vmatmul.mubr.bf16.gmra.mrb[0].mxu0 %v1287
      %v1607 = vpop.f32.mrb[0].mxu0
      %v1608 = vadd.f32 %v1436, %v1607
      %v1609 = vpop.f32.mrb[0].mxu0
      %v1610 = vpop.f32.mrb[0].mxu0
      %v1611 = vadd.f32 %v1439, %v1610
      %v1612 = vpop.f32.mrb[0].mxu0
      %1613 = vmatprep.mubr.bf16.mxu0 0
      %1614 = vmatmul.mubr.bf16.gmra.mrb[0].mxu0 %v1290
      %v1615 = vpop.f32.mrb[0].mxu0
      %v1616 = vadd.f32 %v1444, %v1615
      %v1617 = vpop.f32.mrb[0].mxu0
      %v1618 = vpop.f32.mrb[0].mxu0
      %v1619 = vadd.f32 %v1447, %v1618
      %v1620 = vpop.f32.mrb[0].mxu0
      %1621 = vmatprep.mubr.bf16.mxu0 0
      %1622 = vmatmul.mubr.bf16.gmra.mrb[0].mxu0 %v1293
      %v1623 = vpop.f32.mrb[0].mxu0
      %v1624 = vadd.f32 %v1452, %v1623
      %v1625 = vpop.f32.mrb[0].mxu0
      %v1626 = vpop.f32.mrb[0].mxu0
      %v1627 = vadd.f32 %v1455, %v1626
      %v1628 = vpop.f32.mrb[0].mxu0
      %1629 = vmatprep.mubr.bf16.mxu0 0
      %1630 = vmatmul.mubr.bf16.gmra.mrb[0].mxu0 %v1296
      %v1631 = vpop.f32.mrb[0].mxu0
      %v1632 = vadd.f32 %v1460, %v1631
      %v1633 = vpop.f32.mrb[0].mxu0
      %v1634 = vpop.f32.mrb[0].mxu0
      %v1635 = vadd.f32 %v1463, %v1634
      %v1636 = vpop.f32.mrb[0].mxu0
      %1637 = vdwg.mxu0
      %v1638 = vld [vmem:[#allocation2 + $0x10] sm:$0xff]
      %v1639 = vld [vmem:[#allocation2 + $0x18] sm:$0xff]
      %v1640 = vld [vmem:[#allocation2 + $0x20] sm:$0xff]
      %v1641 = vld [vmem:[#allocation2 + $0x28] sm:$0xff]
      %v1642 = vld [vmem:[#allocation2 + $0x30] sm:$0xff]
      %v1643 = vld [vmem:[#allocation2 + $0x38] sm:$0xff]
      %v1644 = vld [vmem:[#allocation2 + $0x40] sm:$0xff]
      %v1645 = vld [vmem:[#allocation2 + $0x48] sm:$0xff]
      %v1646 = vld [vmem:[#allocation2 + $0x50] sm:$0xff]
      %v1647 = vld [vmem:[#allocation2 + $0x58] sm:$0xff]
      %v1648 = vld [vmem:[#allocation2 + $0x60] sm:$0xff]
      %v1649 = vld [vmem:[#allocation2 + $0x68] sm:$0xff]
      %v1650 = vld [vmem:[#allocation2 + $0x70] sm:$0xff]
      %v1651 = vld [vmem:[#allocation2 + $0x78] sm:$0xff]
      %v1652 = vld [vmem:[#allocation2 + $0x80] sm:$0xff]
      %v1653 = vld [vmem:[#allocation2 + $0x88] sm:$0xff]
      %s1654 = scalar_lea.vmem %s1, 16
      %v1655 = vld [vmem:[%s1654] sm:$0xf]
      %v1656 = vld [vmem:[%s1654 + $0x4] sm:$0x3]
      %v1659 = vunpack.c.l.b16 %v1655
      %v1660 = vunpack.c.l.b16 %v1656
      %v1661 = vpack.c.b16 %v1660, %v1659
      %v1663 = vsel %vm1252, %v1638, 0
      %v1666 = vsel %vm1252, %v1639, 0
      %v1669 = vsel %vm1252, %v1640, 0
      %v1672 = vsel %vm1252, %v1641, 0
      %v1675 = vsel %vm1252, %v1642, 0
      %v1678 = vsel %vm1252, %v1643, 0
      %v1681 = vsel %vm1252, %v1644, 0
      %v1684 = vsel %vm1252, %v1645, 0
      %v1687 = vsel %vm1252, %v1646, 0
      %v1690 = vsel %vm1252, %v1647, 0
      %v1693 = vsel %vm1252, %v1648, 0
      %v1696 = vsel %vm1252, %v1649, 0
      %v1699 = vsel %vm1252, %v1650, 0
      %v1702 = vsel %vm1252, %v1651, 0
      %v1705 = vsel %vm1252, %v1652, 0
      %v1708 = vsel %vm1252, %v1653, 0
      %v1711 = vsel %vm1301, %v1661, 0
      %1713 = vmatprep.subr.bf16.mxu0 0
      %1714 = vmatpush1.bf16.msra.mxu0 %v1711
      %1715 = vmatprep.subr.bf16.mxu0 0
      %1716 = vmatpush1.bf16.msra.mxu0 0
      %1717 = vmatprep.subr.bf16.mxu0 0
      %1718 = vmatpush1.bf16.msra.mxu0 0
      %1719 = vmatprep.subr.bf16.mxu0 0
      %1720 = vmatpush1.bf16.msra.mxu0 0
      %1721 = vmatprep.subr.bf16.mxu0 0
      %1722 = vmatpush1.bf16.msra.mxu0 0
      %1723 = vmatprep.subr.bf16.mxu0 0
      %1724 = vmatpush1.bf16.msra.mxu0 0
      %1725 = vmatprep.subr.bf16.mxu0 0
      %1726 = vmatpush1.bf16.msra.mxu0 0
      %1727 = vmatprep.subr.bf16.mxu0 0
      %1728 = vmatpush1.bf16.msra.mxu0 0
      %1729 = vmatprep.subr.bf16.mxu0 0
      %1730 = vmatpush1.bf16.msra.mxu0 0
      %1731 = vmatprep.subr.bf16.mxu0 0
      %1732 = vmatpush1.bf16.msra.mxu0 0
      %1733 = vmatprep.subr.bf16.mxu0 0
      %1734 = vmatpush1.bf16.msra.mxu0 0
      %1735 = vmatprep.subr.bf16.mxu0 0
      %1736 = vmatpush1.bf16.msra.mxu0 0
      %1737 = vmatprep.subr.bf16.mxu0 0
      %1738 = vmatpush1.bf16.msra.mxu0 0
      %1739 = vmatprep.subr.bf16.mxu0 0
      %1740 = vmatpush1.bf16.msra.mxu0 0
      %1741 = vmatprep.subr.bf16.mxu0 0
      %1742 = vmatpush1.bf16.msra.mxu0 0
      %1743 = vmatprep.subr.bf16.mxu0 0
      %1744 = vmatpush1.bf16.msra.mxu0 0
      %1745 = vmatprep.mubr.bf16.mxu0 0
      %1746 = vmatmul.mubr.bf16.gmra.mrb[0].mxu0 %v1663
      %v1747 = vpop.f32.mrb[0].mxu0
      %v1748 = vadd.f32 0.0, %v1747
      %v1749 = vpop.f32.mrb[0].mxu0
      %v1750 = vpop.f32.mrb[0].mxu0
      %v1751 = vadd.f32 0.0, %v1750
      %v1752 = vpop.f32.mrb[0].mxu0
      %1753 = vmatprep.mubr.bf16.mxu0 0
      %1754 = vmatmul.mubr.bf16.gmra.mrb[0].mxu0 %v1666
      %v1755 = vpop.f32.mrb[0].mxu0
      %v1756 = vadd.f32 0.0, %v1755
      %v1757 = vpop.f32.mrb[0].mxu0
      %v1758 = vpop.f32.mrb[0].mxu0
      %v1759 = vadd.f32 0.0, %v1758
      %v1760 = vpop.f32.mrb[0].mxu0
      %1761 = vmatprep.mubr.bf16.mxu0 0
      %1762 = vmatmul.mubr.bf16.gmra.mrb[0].mxu0 %v1669
      %v1763 = vpop.f32.mrb[0].mxu0
      %v1764 = vadd.f32 0.0, %v1763
      %v1765 = vpop.f32.mrb[0].mxu0
      %v1766 = vpop.f32.mrb[0].mxu0
      %v1767 = vadd.f32 0.0, %v1766
      %v1768 = vpop.f32.mrb[0].mxu0
      %1769 = vmatprep.mubr.bf16.mxu0 0
      %1770 = vmatmul.mubr.bf16.gmra.mrb[0].mxu0 %v1672
      %v1771 = vpop.f32.mrb[0].mxu0
      %v1772 = vadd.f32 0.0, %v1771
      %v1773 = vpop.f32.mrb[0].mxu0
      %v1774 = vpop.f32.mrb[0].mxu0
      %v1775 = vadd.f32 0.0, %v1774
      %v1776 = vpop.f32.mrb[0].mxu0
      %1777 = vmatprep.mubr.bf16.mxu0 0
      %1778 = vmatmul.mubr.bf16.gmra.mrb[0].mxu0 %v1675
      %v1779 = vpop.f32.mrb[0].mxu0
      %v1780 = vadd.f32 0.0, %v1779
      %v1781 = vpop.f32.mrb[0].mxu0
      %v1782 = vpop.f32.mrb[0].mxu0
      %v1783 = vadd.f32 0.0, %v1782
      %v1784 = vpop.f32.mrb[0].mxu0
      %1785 = vmatprep.mubr.bf16.mxu0 0
      %1786 = vmatmul.mubr.bf16.gmra.mrb[0].mxu0 %v1678
      %v1787 = vpop.f32.mrb[0].mxu0
      %v1788 = vadd.f32 0.0, %v1787
      %v1789 = vpop.f32.mrb[0].mxu0
      %v1790 = vpop.f32.mrb[0].mxu0
      %v1791 = vadd.f32 0.0, %v1790
      %v1792 = vpop.f32.mrb[0].mxu0
      %1793 = vmatprep.mubr.bf16.mxu0 0
      %1794 = vmatmul.mubr.bf16.gmra.mrb[0].mxu0 %v1681
      %v1795 = vpop.f32.mrb[0].mxu0
      %v1796 = vadd.f32 0.0, %v1795
      %v1797 = vpop.f32.mrb[0].mxu0
      %v1798 = vpop.f32.mrb[0].mxu0
      %v1799 = vadd.f32 0.0, %v1798
      %v1800 = vpop.f32.mrb[0].mxu0
      %1801 = vmatprep.mubr.bf16.mxu0 0
      %1802 = vmatmul.mubr.bf16.gmra.mrb[0].mxu0 %v1684
      %v1803 = vpop.f32.mrb[0].mxu0
      %v1804 = vadd.f32 0.0, %v1803
      %v1805 = vpop.f32.mrb[0].mxu0
      %v1806 = vpop.f32.mrb[0].mxu0
      %v1807 = vadd.f32 0.0, %v1806
      %v1808 = vpop.f32.mrb[0].mxu0
      %1809 = vmatprep.mubr.bf16.mxu0 0
      %1810 = vmatmul.mubr.bf16.gmra.mrb[0].mxu0 %v1687
      %v1811 = vpop.f32.mrb[0].mxu0
      %v1812 = vadd.f32 0.0, %v1811
      %v1813 = vpop.f32.mrb[0].mxu0
      %v1814 = vpop.f32.mrb[0].mxu0
      %v1815 = vadd.f32 0.0, %v1814
      %v1816 = vpop.f32.mrb[0].mxu0
      %1817 = vmatprep.mubr.bf16.mxu0 0
      %1818 = vmatmul.mubr.bf16.gmra.mrb[0].mxu0 %v1690
      %v1819 = vpop.f32.mrb[0].mxu0
      %v1820 = vadd.f32 0.0, %v1819
      %v1821 = vpop.f32.mrb[0].mxu0
      %v1822 = vpop.f32.mrb[0].mxu0
      %v1823 = vadd.f32 0.0, %v1822
      %v1824 = vpop.f32.mrb[0].mxu0
      %1825 = vmatprep.mubr.bf16.mxu0 0
      %1826 = vmatmul.mubr.bf16.gmra.mrb[0].mxu0 %v1693
      %v1827 = vpop.f32.mrb[0].mxu0
      %v1828 = vadd.f32 0.0, %v1827
      %v1829 = vpop.f32.mrb[0].mxu0
      %v1830 = vpop.f32.mrb[0].mxu0
      %v1831 = vadd.f32 0.0, %v1830
      %v1832 = vpop.f32.mrb[0].mxu0
      %1833 = vmatprep.mubr.bf16.mxu0 0
      %1834 = vmatmul.mubr.bf16.gmra.mrb[0].mxu0 %v1696
      %v1835 = vpop.f32.mrb[0].mxu0
      %v1836 = vadd.f32 0.0, %v1835
      %v1837 = vpop.f32.mrb[0].mxu0
      %v1838 = vpop.f32.mrb[0].mxu0
      %v1839 = vadd.f32 0.0, %v1838
      %v1840 = vpop.f32.mrb[0].mxu0
      %1841 = vmatprep.mubr.bf16.mxu0 0
      %1842 = vmatmul.mubr.bf16.gmra.mrb[0].mxu0 %v1699
      %v1843 = vpop.f32.mrb[0].mxu0
      %v1844 = vadd.f32 0.0, %v1843
      %v1845 = vpop.f32.mrb[0].mxu0
      %v1846 = vpop.f32.mrb[0].mxu0
      %v1847 = vadd.f32 0.0, %v1846
      %v1848 = vpop.f32.mrb[0].mxu0
      %1849 = vmatprep.mubr.bf16.mxu0 0
      %1850 = vmatmul.mubr.bf16.gmra.mrb[0].mxu0 %v1702
      %v1851 = vpop.f32.mrb[0].mxu0
      %v1852 = vadd.f32 0.0, %v1851
      %v1853 = vpop.f32.mrb[0].mxu0
      %v1854 = vpop.f32.mrb[0].mxu0
      %v1855 = vadd.f32 0.0, %v1854
      %v1856 = vpop.f32.mrb[0].mxu0
      %1857 = vmatprep.mubr.bf16.mxu0 0
      %1858 = vmatmul.mubr.bf16.gmra.mrb[0].mxu0 %v1705
      %v1859 = vpop.f32.mrb[0].mxu0
      %v1860 = vadd.f32 0.0, %v1859
      %v1861 = vpop.f32.mrb[0].mxu0
      %v1862 = vpop.f32.mrb[0].mxu0
      %v1863 = vadd.f32 0.0, %v1862
      %v1864 = vpop.f32.mrb[0].mxu0
      %1865 = vmatprep.mubr.bf16.mxu0 0
      %1866 = vmatmul.mubr.bf16.gmra.mrb[0].mxu0 %v1708
      %v1867 = vpop.f32.mrb[0].mxu0
      %v1868 = vadd.f32 0.0, %v1867
      %v1869 = vpop.f32.mrb[0].mxu0
      %v1870 = vpop.f32.mrb[0].mxu0
      %v1871 = vadd.f32 0.0, %v1870
      %v1872 = vpop.f32.mrb[0].mxu0
      %1873 = vdwg.mxu0
      %v1874 = vadd.f32 %v1512, %v1748
      %v1875 = vadd.f32 %v1515, %v1751
      %v1876 = vadd.f32 %v1520, %v1756
      %v1877 = vadd.f32 %v1523, %v1759
      %v1878 = vadd.f32 %v1528, %v1764
      %v1879 = vadd.f32 %v1531, %v1767
      %v1880 = vadd.f32 %v1536, %v1772
      %v1881 = vadd.f32 %v1539, %v1775
      %v1882 = vadd.f32 %v1544, %v1780
      %v1883 = vadd.f32 %v1547, %v1783
      %v1884 = vadd.f32 %v1552, %v1788
      %v1885 = vadd.f32 %v1555, %v1791
      %v1886 = vadd.f32 %v1560, %v1796
      %v1887 = vadd.f32 %v1563, %v1799
      %v1888 = vadd.f32 %v1568, %v1804
      %v1889 = vadd.f32 %v1571, %v1807
      %v1890 = vadd.f32 %v1576, %v1812
      %v1891 = vadd.f32 %v1579, %v1815
      %v1892 = vadd.f32 %v1584, %v1820
      %v1893 = vadd.f32 %v1587, %v1823
      %v1894 = vadd.f32 %v1592, %v1828
      %v1895 = vadd.f32 %v1595, %v1831
      %v1896 = vadd.f32 %v1600, %v1836
      %v1897 = vadd.f32 %v1603, %v1839
      %v1898 = vadd.f32 %v1608, %v1844
      %v1899 = vadd.f32 %v1611, %v1847
      %v1900 = vadd.f32 %v1616, %v1852
      %v1901 = vadd.f32 %v1619, %v1855
      %v1902 = vadd.f32 %v1624, %v1860
      %v1903 = vadd.f32 %v1627, %v1863
      %v1904 = vadd.f32 %v1632, %v1868
      %v1905 = vadd.f32 %v1635, %v1871
      %v1906 = vld [vmem:[%s2] sm:$0x1]
      %v1908 = vlaneseq
      %v1909 = vshrl.u32 %v1908, 7
      %v1910 = vsub.s32 0, %v1909
      %v1911 = vrot.slane %v1906, %v1910
      %v1913 = vadd.f32 %v1874, %v1911
      %v1914 = vadd.f32 %v1875, %v1911
      %v1915 = vadd.f32 %v1876, %v1911
      %v1916 = vadd.f32 %v1877, %v1911
      %v1917 = vadd.f32 %v1878, %v1911
      %v1918 = vadd.f32 %v1879, %v1911
      %v1919 = vadd.f32 %v1880, %v1911
      %v1920 = vadd.f32 %v1881, %v1911
      %v1921 = vadd.f32 %v1882, %v1911
      %v1922 = vadd.f32 %v1883, %v1911
      %v1923 = vadd.f32 %v1884, %v1911
      %v1924 = vadd.f32 %v1885, %v1911
      %v1925 = vadd.f32 %v1886, %v1911
      %v1926 = vadd.f32 %v1887, %v1911
      %v1927 = vadd.f32 %v1888, %v1911
      %v1928 = vadd.f32 %v1889, %v1911
      %v1929 = vadd.f32 %v1890, %v1911
      %v1930 = vadd.f32 %v1891, %v1911
      %v1931 = vadd.f32 %v1892, %v1911
      %v1932 = vadd.f32 %v1893, %v1911
      %v1933 = vadd.f32 %v1894, %v1911
      %v1934 = vadd.f32 %v1895, %v1911
      %v1935 = vadd.f32 %v1896, %v1911
      %v1936 = vadd.f32 %v1897, %v1911
      %v1937 = vadd.f32 %v1898, %v1911
      %v1938 = vadd.f32 %v1899, %v1911
      %v1939 = vadd.f32 %v1900, %v1911
      %v1940 = vadd.f32 %v1901, %v1911
      %v1941 = vadd.f32 %v1902, %v1911
      %v1942 = vadd.f32 %v1903, %v1911
      %v1943 = vadd.f32 %v1904, %v1911
      %v1944 = vadd.f32 %v1905, %v1911
      %v1945 = vmax.f32 %v1913, 0.0
      %v1946 = vmax.f32 %v1914, 0.0
      %v1947 = vmax.f32 %v1915, 0.0
      %v1948 = vmax.f32 %v1916, 0.0
      %v1949 = vmax.f32 %v1917, 0.0
      %v1950 = vmax.f32 %v1918, 0.0
      %v1951 = vmax.f32 %v1919, 0.0
      %v1952 = vmax.f32 %v1920, 0.0
      %v1953 = vmax.f32 %v1921, 0.0
      %v1954 = vmax.f32 %v1922, 0.0
      %v1955 = vmax.f32 %v1923, 0.0
      %v1956 = vmax.f32 %v1924, 0.0
      %v1957 = vmax.f32 %v1925, 0.0
      %v1958 = vmax.f32 %v1926, 0.0
      %v1959 = vmax.f32 %v1927, 0.0
      %v1960 = vmax.f32 %v1928, 0.0
      %v1961 = vmax.f32 %v1929, 0.0
      %v1962 = vmax.f32 %v1930, 0.0
      %v1963 = vmax.f32 %v1931, 0.0
      %v1964 = vmax.f32 %v1932, 0.0
      %v1965 = vmax.f32 %v1933, 0.0
      %v1966 = vmax.f32 %v1934, 0.0
      %v1967 = vmax.f32 %v1935, 0.0
      %v1968 = vmax.f32 %v1936, 0.0
      %v1969 = vmax.f32 %v1937, 0.0
      %v1970 = vmax.f32 %v1938, 0.0
      %v1971 = vmax.f32 %v1939, 0.0
      %v1972 = vmax.f32 %v1940, 0.0
      %v1973 = vmax.f32 %v1941, 0.0
      %v1974 = vmax.f32 %v1942, 0.0
      %v1975 = vmax.f32 %v1943, 0.0
      %v1976 = vmax.f32 %v1944, 0.0
      %v1977 = vpack.c.bf16 %v1946, %v1945
      %v1978 = vpack.c.bf16 %v1948, %v1947
      %v1979 = vpack.c.bf16 %v1950, %v1949
      %v1980 = vpack.c.bf16 %v1952, %v1951
      %v1981 = vpack.c.bf16 %v1954, %v1953
      %v1982 = vpack.c.bf16 %v1956, %v1955
      %v1983 = vpack.c.bf16 %v1958, %v1957
      %v1984 = vpack.c.bf16 %v1960, %v1959
      %v1985 = vpack.c.bf16 %v1962, %v1961
      %v1986 = vpack.c.bf16 %v1964, %v1963
      %v1987 = vpack.c.bf16 %v1966, %v1965
      %v1988 = vpack.c.bf16 %v1968, %v1967
      %v1989 = vpack.c.bf16 %v1970, %v1969
      %v1990 = vpack.c.bf16 %v1972, %v1971
      %v1991 = vpack.c.bf16 %v1974, %v1973
      %v1992 = vpack.c.bf16 %v1976, %v1975
      %v2009 = vunpack.c.l.b16 %v1977
      %v2010 = vunpack.c.h.b16 %v1977
      %v2011 = vunpack.c.l.b16 %v1978
      %v2012 = vunpack.c.h.b16 %v1978
      %v2013 = vunpack.c.l.b16 %v1979
      %v2014 = vunpack.c.h.b16 %v1979
      %v2015 = vunpack.c.l.b16 %v1980
      %v2016 = vunpack.c.h.b16 %v1980
      %v2017 = vunpack.c.l.b16 %v1981
      %v2018 = vunpack.c.h.b16 %v1981
      %v2019 = vunpack.c.l.b16 %v1982
      %v2020 = vunpack.c.h.b16 %v1982
      %v2021 = vunpack.c.l.b16 %v1983
      %v2022 = vunpack.c.h.b16 %v1983
      %v2023 = vunpack.c.l.b16 %v1984
      %v2024 = vunpack.c.h.b16 %v1984
      %v2025 = vunpack.c.l.b16 %v1985
      %v2026 = vunpack.c.h.b16 %v1985
      %v2027 = vunpack.c.l.b16 %v1986
      %v2028 = vunpack.c.h.b16 %v1986
      %v2029 = vunpack.c.l.b16 %v1987
      %v2030 = vunpack.c.h.b16 %v1987
      %v2031 = vunpack.c.l.b16 %v1988
      %v2032 = vunpack.c.h.b16 %v1988
      %v2033 = vunpack.c.l.b16 %v1989
      %v2034 = vunpack.c.h.b16 %v1989
      %v2035 = vunpack.c.l.b16 %v1990
      %v2036 = vunpack.c.h.b16 %v1990
      %v2037 = vunpack.c.l.b16 %v1991
      %v2038 = vunpack.c.h.b16 %v1991
      %v2039 = vunpack.c.l.b16 %v1992
      %v2040 = vunpack.c.h.b16 %v1992
      %v2041 = vpack.c.b16 %v2009, %v2009
      %v2042 = vpack.c.b16 %v2010, %v2010
      %v2043 = vpack.c.b16 %v2011, %v2011
      %v2044 = vpack.c.b16 %v2012, %v2012
      %v2045 = vpack.c.b16 %v2013, %v2013
      %v2046 = vpack.c.b16 %v2014, %v2014
      %v2047 = vpack.c.b16 %v2015, %v2015
      %v2048 = vpack.c.b16 %v2016, %v2016
      %v2049 = vpack.c.b16 %v2017, %v2017
      %v2050 = vpack.c.b16 %v2018, %v2018
      %v2051 = vpack.c.b16 %v2019, %v2019
      %v2052 = vpack.c.b16 %v2020, %v2020
      %v2053 = vpack.c.b16 %v2021, %v2021
      %v2054 = vpack.c.b16 %v2022, %v2022
      %v2055 = vpack.c.b16 %v2023, %v2023
      %v2056 = vpack.c.b16 %v2024, %v2024
      %v2057 = vpack.c.b16 %v2025, %v2025
      %v2058 = vpack.c.b16 %v2026, %v2026
      %v2059 = vpack.c.b16 %v2027, %v2027
      %v2060 = vpack.c.b16 %v2028, %v2028
      %v2061 = vpack.c.b16 %v2029, %v2029
      %v2062 = vpack.c.b16 %v2030, %v2030
      %v2063 = vpack.c.b16 %v2031, %v2031
      %v2064 = vpack.c.b16 %v2032, %v2032
      %v2065 = vpack.c.b16 %v2033, %v2033
      %v2066 = vpack.c.b16 %v2034, %v2034
      %v2067 = vpack.c.b16 %v2035, %v2035
      %v2068 = vpack.c.b16 %v2036, %v2036
      %v2069 = vpack.c.b16 %v2037, %v2037
      %v2070 = vpack.c.b16 %v2038, %v2038
      %v2071 = vpack.c.b16 %v2039, %v2039
      %v2072 = vpack.c.b16 %v2040, %v2040
      %vm2105 = vcmask 60416
      %2106 = vst.msk [vmem:[%s206] sm:$0xf] %vm2105, %v2041
      %2107 = vst.msk [vmem:[%s206 + $0x4] sm:$0xf] %vm2105, %v2042
      %2108 = vst.msk [vmem:[%s206 + $0x8] sm:$0xf] %vm2105, %v2043
      %2109 = vst.msk [vmem:[%s206 + $0xc] sm:$0xf] %vm2105, %v2044
      %2110 = vst.msk [vmem:[%s206 + $0x10] sm:$0xf] %vm2105, %v2045
      %2111 = vst.msk [vmem:[%s206 + $0x14] sm:$0xf] %vm2105, %v2046
      %2112 = vst.msk [vmem:[%s206 + $0x18] sm:$0xf] %vm2105, %v2047
      %2113 = vst.msk [vmem:[%s206 + $0x1c] sm:$0xf] %vm2105, %v2048
      %2114 = vst.msk [vmem:[%s206 + $0x20] sm:$0xf] %vm2105, %v2049
      %2115 = vst.msk [vmem:[%s206 + $0x24] sm:$0xf] %vm2105, %v2050
      %2116 = vst.msk [vmem:[%s206 + $0x28] sm:$0xf] %vm2105, %v2051
      %2117 = vst.msk [vmem:[%s206 + $0x2c] sm:$0xf] %vm2105, %v2052
      %2118 = vst.msk [vmem:[%s206 + $0x30] sm:$0xf] %vm2105, %v2053
      %2119 = vst.msk [vmem:[%s206 + $0x34] sm:$0xf] %vm2105, %v2054
      %2120 = vst.msk [vmem:[%s206 + $0x38] sm:$0xf] %vm2105, %v2055
      %2121 = vst.msk [vmem:[%s206 + $0x3c] sm:$0xf] %vm2105, %v2056
      %2122 = vst.msk [vmem:[%s206 + $0x40] sm:$0xf] %vm2105, %v2057
      %2123 = vst.msk [vmem:[%s206 + $0x44] sm:$0xf] %vm2105, %v2058
      %2124 = vst.msk [vmem:[%s206 + $0x48] sm:$0xf] %vm2105, %v2059
      %2125 = vst.msk [vmem:[%s206 + $0x4c] sm:$0xf] %vm2105, %v2060
      %2126 = vst.msk [vmem:[%s206 + $0x50] sm:$0xf] %vm2105, %v2061
      %2127 = vst.msk [vmem:[%s206 + $0x54] sm:$0xf] %vm2105, %v2062
      %2128 = vst.msk [vmem:[%s206 + $0x58] sm:$0xf] %vm2105, %v2063
      %2129 = vst.msk [vmem:[%s206 + $0x5c] sm:$0xf] %vm2105, %v2064
      %2130 = vst.msk [vmem:[%s206 + $0x60] sm:$0xf] %vm2105, %v2065
      %2131 = vst.msk [vmem:[%s206 + $0x64] sm:$0xf] %vm2105, %v2066
      %2132 = vst.msk [vmem:[%s206 + $0x68] sm:$0xf] %vm2105, %v2067
      %2133 = vst.msk [vmem:[%s206 + $0x6c] sm:$0xf] %vm2105, %v2068
      %2134 = vst.msk [vmem:[%s206 + $0x70] sm:$0xf] %vm2105, %v2069
      %2135 = vst.msk [vmem:[%s206 + $0x74] sm:$0xf] %vm2105, %v2070
      %2136 = vst.msk [vmem:[%s206 + $0x78] sm:$0xf] %vm2105, %v2071
      %2137 = vst.msk [vmem:[%s206 + $0x7c] sm:$0xf] %vm2105, %v2072
      %p2138 = scmp.lt.s32.totalorder %s18, 1
      %s2139 = scalar_select %p2138, %s18, 1
      %p2140 = scmp.lt.s32.totalorder %s19, 0
      %s2141 = scalar_select %p2140, %s19, 0
      %s2142 = smul.addr %s2141, 32
      %s2143 = smul.addr %s2139, 32
      %s2144 = sadd.s32 %s2142, %s2143
      %s2145 = smul.addr %s2144, 4
      %s2146 = scalar_lea.vmem %s3, %s2145
      // Predicated region
      $region33: #{tpu_custom_call.1} parent=31 // pred_check
        %p2147 = pneg %p116
      $region34: #{tpu_custom_call.1} parent=31 // pred_check_branch
        %2149 = sbr.rel (%p2147) target = $region36
      $region35: #{tpu_custom_call.1} parent=31 // pred_region
        _
      $region36: #{tpu_custom_call.1} parent=31 // pred_fallthru
        _
    $region32: #{tpu_custom_call.1} parent=5 // pred_fallthru
      _
    %p2150 = scmp.le.s32.totalorder 2, %s9
    // Predicated region
    $region37: #{tpu_custom_call.1} parent=5 // pred_check
      %p2151 = pneg %p2150
    $region38: #{tpu_custom_call.1} parent=5 // pred_check_branch
      %2153 = sbr.rel (%p2151) target = $region40
    $region39: #{tpu_custom_call.1} parent=5 // pred_region
      %s2154 = ssub.s32 %s9, 2
      // Predicated region
      $region41: #{tpu_custom_call.1} parent=39 // pred_check
        %p2155 = pneg %p122
      $region42: #{tpu_custom_call.1} parent=39 // pred_check_branch
        %2157 = sbr.rel (%p2155) target = $region44
      $region43: #{tpu_custom_call.1} parent=39 // pred_region
        %p2158 = scmp.lt.s32.totalorder %s20, 1
        %s2159 = scalar_select %p2158, %s20, 1
        %p2160 = scmp.lt.s32.totalorder %s21, 0
        %s2161 = scalar_select %p2160, %s21, 0
        %s2162 = smul.addr %s2161, 32
        %s2163 = smul.addr %s2159, 32
        %s2164 = sadd.s32 %s2162, %s2163
        %s2165 = smul.addr %s2164, 4
        %s2166 = scalar_lea.vmem %s3, %s2165
      $region44: #{tpu_custom_call.1} parent=39 // pred_fallthru
        _
    $region40: #{tpu_custom_call.1} parent=5 // pred_fallthru
      _
  $region6: #{tpu_custom_call.1} parent=0 // loop_footer
    %s13 = sadd.s32 1, %s9
  $region7: #{tpu_custom_call.1} parent=0 // loop_footer_branch
    %8 = sbr.rel target = $region3
  $region8: #{tpu_custom_call.1} parent=0 // loop_exit
    _

</llo_original>
